<compile_context>
chip_gen: v6e
topology: v6e:2x2x1
jax: 0.10.0
libtpu: 0.0.40
codegen_flags: <defaults>
</compile_context>

<pallas_src>
import functools
import math

import jax
import jax.numpy as jnp
import numpy as np
from jax.experimental import pallas as pl
from jax.experimental.pallas import tpu as pltpu


# ----------------------------------------------------------------------------
# tanh-form GELU (torch.nn.GELU(approximate='tanh'); max abs deviation from the
# exact erf form ~3e-3).  jnp.tanh lowers to the EUP slot; the rest is ~8 cheap
# VALU ops per element.  Used identically in-kernel and in the JAX reference.
# ----------------------------------------------------------------------------
_GELU_C = np.float32(math.sqrt(2.0 / math.pi))
_GELU_A = np.float32(0.044715)


def _gelu_tanh(x):
    return 0.5 * x * (1.0 + jnp.tanh(_GELU_C * (x + _GELU_A * x * x * x)))


# ----------------------------------------------------------------------------
# Routing_Module + AdaptiveAvgPool2d(1): tiled per-image pixel reduction on the
# MXU, then the tiny routing MLP on the last chunk.
#   grid = (B, HWp // tile_n); batch "parallel", chunk axis "arbitrary".
# ----------------------------------------------------------------------------
def _routing_kernel(x_ref, h_ref, w1xt_ref, w1ht_ref, b1_ref, w2t_ref, b2_ref,
                    logit_ref, hidden_ref, acc_ref, *, inv_hw):
    j = pl.program_id(1)

    @pl.when(j == 0)
    def _():
        acc_ref[...] = jnp.zeros_like(acc_ref)

    # Pixel sum of this (C, tile_n) chunk on the MXU (contraction against a
    # ones column) instead of a lane-axis VALU/XLU reduce.
    x = x_ref[0]                                                   # (C, Tn)
    ones = jnp.ones((x.shape[1], 1), jnp.float32)
    acc_ref[...] += jnp.dot(x, ones, preferred_element_type=jnp.float32)

    @pl.when(j == pl.num_programs(1) - 1)
    def _():
        xg = acc_ref[...] * inv_hw                                 # (C, 1) mean
        # conv1(cat([x_global, h])) in column form: W1x^T xg + W1h^T h + b1
        z = (jnp.dot(w1xt_ref[...], xg, preferred_element_type=jnp.float32)
             + jnp.dot(w1ht_ref[...], h_ref[0], preferred_element_type=jnp.float32)
             + b1_ref[...])                                        # (hdim, 1)
        hid = _gelu_tanh(z)
        lg = (jnp.dot(w2t_ref[...], hid, preferred_element_type=jnp.float32)
              + b2_ref[...])                                       # (E, 1)
        logit_ref[0] = jnp.maximum(lg, 0.0)                        # ReLU
        hidden_ref[0] = hid


def routing_forward(x3p, hid_col, w1xt, w1ht, b1col, w2t, b2col, *,
                    tile_n, true_hw):
    b, c, hwp = x3p.shape
    hdim = w1ht.shape[0]
    num_e = w2t.shape[0]
    assert hwp % tile_n == 0
    kernel = functools.partial(_routing_kernel, inv_hw=float(1.0 / true_hw))
    return pl.pallas_call(
        kernel,
        out_shape=(jax.ShapeDtypeStruct((b, num_e, 1), jnp.float32),
                   jax.ShapeDtypeStruct((b, hdim, 1), jnp.float32)),
        grid_spec=pltpu.PrefetchScalarGridSpec(
            num_scalar_prefetch=0,
            grid=(b, hwp // tile_n),
            in_specs=[
                pl.BlockSpec((1, c, tile_n), lambda i, j: (i, 0, j)),  # x chunk
                pl.BlockSpec((1, hdim, 1), lambda i, j: (i, 0, 0)),    # h column
                pl.BlockSpec((hdim, c), lambda i, j: (0, 0)),          # W1x^T
                pl.BlockSpec((hdim, hdim), lambda i, j: (0, 0)),       # W1h^T
                pl.BlockSpec((hdim, 1), lambda i, j: (0, 0)),          # b1 col
                pl.BlockSpec((num_e, hdim), lambda i, j: (0, 0)),      # W2^T
                pl.BlockSpec((num_e, 1), lambda i, j: (0, 0)),         # b2 col
            ],
            out_specs=(pl.BlockSpec((1, num_e, 1), lambda i, j: (i, 0, 0)),
                       pl.BlockSpec((1, hdim, 1), lambda i, j: (i, 0, 0))),
            scratch_shapes=[pltpu.VMEM((c, 1), jnp.float32)],
        ),
        compiler_params=pltpu.CompilerParams(
            dimension_semantics=("parallel", "arbitrary"),
            vmem_limit_bytes=32 * 1024 * 1024),
    )(x3p, hid_col, w1xt, w1ht, b1col, w2t, b2col)


# ----------------------------------------------------------------------------
# Fused expert bank: one matmul pair per (image, pixel-tile), routing logits
# folded in via a tiny per-image row-scale on the GELU output.
#   z = W1^T x + b1 ; h = GELU(z) ; y = W2^T (h * scale_h[b]) + b2_vec[b]
# ----------------------------------------------------------------------------
def _expert_bank_kernel(x_ref, w1t_ref, b1_ref, w2t_ref, scale_ref, b2_ref,
                        o_ref):
    # fc1 (single-pass bf16 MXU, f32 accumulate)
    x = x_ref[0].astype(jnp.bfloat16)                              # (C, Tn)
    w1t = w1t_ref[...].astype(jnp.bfloat16)                        # (Hp, C)
    z = (jnp.dot(w1t, x, preferred_element_type=jnp.float32)
         + b1_ref[...])                                            # (Hp, Tn)
    h = _gelu_tanh(z)
    # fold the per-image routing logits: scale each expert's hidden rows
    hs = (h * scale_ref[0]).astype(jnp.bfloat16)                   # (Hp, Tn)
    w2t = w2t_ref[...].astype(jnp.bfloat16)                        # (C, Hp)
    y = (jnp.dot(w2t, hs, preferred_element_type=jnp.float32)
         + b2_ref[0])                                              # (C, Tn)
    o_ref[0] = y.astype(o_ref.dtype)


def expert_bank_forward(x3p, w1t, b1col, w2t, scale_h, b2_vec, *, tile_n):
    b, c, hwp = x3p.shape
    hp = w1t.shape[0]
    assert hwp % tile_n == 0
    return pl.pallas_call(
        _expert_bank_kernel,
        out_shape=jax.ShapeDtypeStruct((b, c, hwp), x3p.dtype),
        grid_spec=pltpu.PrefetchScalarGridSpec(
            num_scalar_prefetch=0,
            grid=(b, hwp // tile_n),
            in_specs=[
                pl.BlockSpec((1, c, tile_n), lambda i, j: (i, 0, j)),  # x tile
                pl.BlockSpec((hp, c), lambda i, j: (0, 0)),            # W1^T (resident)
                pl.BlockSpec((hp, 1), lambda i, j: (0, 0)),            # b1   (resident)
                pl.BlockSpec((c, hp), lambda i, j: (0, 0)),            # W2^T (resident)
                pl.BlockSpec((1, hp, 1), lambda i, j: (i, 0, 0)),      # logit scale
                pl.BlockSpec((1, c, 1), lambda i, j: (i, 0, 0)),       # sum_e l_e b2_e
            ],
            out_specs=pl.BlockSpec((1, c, tile_n), lambda i, j: (i, 0, j)),
        ),
        compiler_params=pltpu.CompilerParams(
            dimension_semantics=("parallel", "parallel"),
            vmem_limit_bytes=32 * 1024 * 1024),
    )(x3p, w1t, b1col, w2t, scale_h, b2_vec)


def _pick_pixel_tile(hw_pad, c, hp, budget_bytes=12 * 1024 * 1024):
    # Live VMEM bytes per lane of the expert-bank tile: double-buffered f32
    # x/out blocks (2*2*C) plus the f32 GELU intermediate + its bf16 copy
    # (~3*Hp).  Keep it under a conservative budget valid on v5e/v6e/v7x.
    per_lane = 4 * (4 * c + 3 * hp)
    cap = max(128, budget_bytes // per_lane)
    for t in (8192, 4096, 2048, 1024, 512, 256, 128):
        if t <= cap and hw_pad % t == 0:
            return t
    return 128          # hw_pad is always a multiple of 128


# ----------------------------------------------------------------------------
# MLP_Bank wrapper (parameter setup + layout glue in plain JAX, fully jitted)
# ----------------------------------------------------------------------------
class MLPBankPallas:
    def __init__(self, n_feats, mlp_ratio_list=(1, 2, 4), hidden_dim=16, key=None):
        if key is None:
            key = jax.random.PRNGKey(0)
        c = n_feats
        self.n_feats = c
        self.num_experts = len(mlp_ratio_list)
        self.hidden_dim = hidden_dim
        h_list = [int(r * c) for r in mlp_ratio_list]
        self.h_list = h_list
        htot = sum(h_list)
        htot_pad = ((htot + 7) // 8) * 8     # pad only the TOTAL hidden width
        self.htot_pad = htot_pad

        keys = jax.random.split(key, 4 * self.num_experts + 4)

        # Per-expert 1x1-conv (dense) weights, kept for the reference check,
        # then concatenated at true widths.
        w1s, b1s, w2s, b2s = [], [], [], []
        self.expert_params = []
        for i, hi in enumerate(h_list):
            k1, k2, k3, k4 = keys[4 * i:4 * i + 4]
            w1 = jax.random.normal(k1, (c, hi), jnp.float32) / np.sqrt(c)
            b1 = jax.random.normal(k2, (hi,), jnp.float32) * 0.01
            w2 = jax.random.normal(k3, (hi, c), jnp.float32) / np.sqrt(hi)
            b2 = jax.random.normal(k4, (c,), jnp.float32) * 0.01
            self.expert_params.append((w1, b1, w2, b2))
            w1s.append(w1); b1s.append(b1); w2s.append(w2); b2s.append(b2)

        pad = htot_pad - htot
        w1cat = jnp.concatenate(w1s, axis=1)                    # (C, Htot)
        b1cat = jnp.concatenate(b1s, axis=0)                    # (Htot,)
        w2cat = jnp.concatenate(w2s, axis=0)                    # (Htot, C)
        self.w1t = jnp.pad(w1cat.T, ((0, pad), (0, 0)))         # (Hp, C)
        self.b1col = jnp.pad(b1cat, ((0, pad),))[:, None]       # (Hp, 1)
        self.w2t = jnp.pad(w2cat.T, ((0, 0), (0, pad)))         # (C, Hp)
        self.b2stack = jnp.stack(b2s)                           # (E, C)

        # expert-selection matrix: scale_h = logit @ sel (padded rows -> 0)
        sel = np.zeros((self.num_experts, htot_pad), np.float32)
        off = 0
        for e, hi in enumerate(h_list):
            sel[e, off:off + hi] = 1.0
            off += hi
        self.sel = jnp.asarray(sel)                             # (E, Hp)

        # Routing module: conv1 (C+16 -> 16) split into x / hidden halves.
        kr1, kr2, kr3, kr4 = keys[4 * self.num_experts:]
        w_r1 = jax.random.normal(kr1, (c + hidden_dim, hidden_dim), jnp.float32) \
            / np.sqrt(c + hidden_dim)
        self.w_r1x = w_r1[:c]                                   # (C, 16)
        self.w_r1h = w_r1[c:]                                   # (16, 16)
        self.b_r1 = (jax.random.normal(kr2, (hidden_dim,), jnp.float32) * 0.01)[None, :]
        self.w_r2 = jax.random.normal(kr3, (hidden_dim, self.num_experts),
                                      jnp.float32) / np.sqrt(hidden_dim)
        self.b_r2 = (jax.random.normal(kr4, (self.num_experts,), jnp.float32) * 0.01)[None, :]

        # Column-form copies for the routing kernel (no in-kernel transposes).
        self.w_r1x_t = self.w_r1x.T                             # (16, C)
        self.w_r1h_t = self.w_r1h.T                             # (16, 16)
        self.b_r1_col = self.b_r1.T                             # (16, 1)
        self.w_r2_t = self.w_r2.T                               # (E, 16)
        self.b_r2_col = self.b_r2.T                             # (E, 1)

        # Single jitted program: routing + tiny fold + expert bank.
        self._forward = jax.jit(self._forward_impl)

    def _forward_impl(self, x_nchw, hidden_nc11):
        b, c, hgt, wid = x_nchw.shape
        assert c == self.n_feats
        hw = hgt * wid
        hw_pad = ((hw + 127) // 128) * 128       # lane-dense tiles
        tile_n = _pick_pixel_tile(hw_pad, c, self.htot_pad)

        x3 = x_nchw.reshape(b, c, hw)            # layout-free reshape
        if hw_pad != hw:
            x3 = jnp.pad(x3, ((0, 0), (0, 0), (0, hw_pad - hw)))  # zero-pad pixels
        hid_col = hidden_nc11.reshape(b, self.hidden_dim, 1)

        # Routing (includes AdaptiveAvgPool2d(1)); inv_hw uses the TRUE hw so
        # the mean stays exact despite zero padding.
        logit_col, hidden_col = routing_forward(
            x3, hid_col, self.w_r1x_t, self.w_r1h_t, self.b_r1_col,
            self.w_r2_t, self.b_r2_col, tile_n=tile_n, true_hw=hw)
        logit = logit_col.reshape(b, self.num_experts)          # (B, E)

        # Fold routing logits into tiny per-image vectors (mathematically
        # sum_e l_e (W2_e^T GELU_e + b2_e)); W1/W2 stay grid-resident weights.
        scale_h = (logit @ self.sel)[:, :, None]                # (B, Hp, 1)
        b2_vec = (logit @ self.b2stack)[:, :, None]             # (B, C, 1)

        out3 = expert_bank_forward(x3, self.w1t, self.b1col, self.w2t,
                                   scale_h, b2_vec, tile_n=tile_n)
        if hw_pad != hw:
            out3 = out3[:, :, :hw]
        out = out3.reshape(b, c, hgt, wid)
        hidden_new = hidden_col.reshape(b, self.hidden_dim, 1, 1)
        logit5 = logit.reshape(b, self.num_experts, 1, 1, 1)    # logit.unsqueeze(-1)
        return out, hidden_new, logit5

    def __call__(self, x_nchw, hidden_nc11):
        return self._forward(x_nchw, hidden_nc11)


# ----------------------------------------------------------------------------
# Plain-JAX reference (unfused per-expert path, f32 everywhere, same tanh GELU)
# ----------------------------------------------------------------------------
def _reference_forward(model, x, hidden):
    b, c, hgt, wid = x.shape
    hw = hgt * wid
    xr = x.reshape(b, c, hw)
    xg = jnp.mean(xr, axis=2)
    hid = hidden.reshape(b, -1)
    z = xg @ model.w_r1x + hid @ model.w_r1h + model.b_r1
    hidden_new = _gelu_tanh(z)
    logit = jnp.maximum(hidden_new @ model.w_r2 + model.b_r2, 0.0)
    out = jnp.zeros_like(xr)
    for e in range(model.num_experts):
        w1, b1, w2, b2 = model.expert_params[e]
        h = _gelu_tanh(jnp.einsum('ch,bcn->bhn', w1, xr) + b1[None, :, None])
        ye = jnp.einsum('hc,bhn->bcn', w2, h) + b2[None, :, None]
        out = out + logit[:, e][:, None, None] * ye
    return out.reshape(b, c, hgt, wid), hidden_new, logit


if __name__ == "__main__":
    key = jax.random.PRNGKey(0)
    kx, kh, kp = jax.random.split(key, 3)

    b, c, h, w = 2, 8, 16, 16            # n_feats = 8
    x = jax.random.normal(kx, (b, c, h, w), jnp.float32)
    hidden = jax.random.normal(kh, (b, 16, 1, 1), jnp.float32)

    model = MLPBankPallas(n_feats=c, mlp_ratio_list=(1, 2, 4), hidden_dim=16, key=kp)
    out, hidden_new, logit = model(x, hidden)
    out, hidden_new, logit = jax.block_until_ready((out, hidden_new, logit))

    assert out.shape == (b, c, h, w)
    assert hidden_new.shape == (b, 16, 1, 1)
    assert logit.shape == (b, 3, 1, 1, 1)
    assert bool(jnp.all(jnp.isfinite(out)))

    # Numerical check against the unfused plain-JAX reference.  The tolerance
    # covers the bf16 matmul operands in the expert-bank kernel (~few 1e-3
    # relative); the GELU form is identical in kernel and reference.
    out_ref, hid_ref, logit_ref = _reference_forward(model, x, hidden)
    rel = float(jnp.linalg.norm(out - out_ref) / (jnp.linalg.norm(out_ref) + 1e-6))
    assert rel < 2e-2, f"output mismatch: rel={rel}"
    assert float(jnp.max(jnp.abs(hidden_new.reshape(b, -1) - hid_ref))) < 1e-2
    assert float(jnp.max(jnp.abs(logit.reshape(b, -1) - logit_ref))) < 1e-2

    print("KERNEL_OK")
</pallas_src>

<mosaic_0001>
module attributes {stable_mosaic.version = 11 : i64} {
  func.func @_routing_kernel(%arg0: i32, %arg1: i32, %arg2: memref<1x8x256xf32, #tpu.memory_space<vmem>>, %arg3: memref<1x16x1xf32, #tpu.memory_space<vmem>>, %arg4: memref<16x8xf32, #tpu.memory_space<vmem>>, %arg5: memref<16x16xf32, #tpu.memory_space<vmem>>, %arg6: memref<16x1xf32, #tpu.memory_space<vmem>>, %arg7: memref<3x16xf32, #tpu.memory_space<vmem>>, %arg8: memref<3x1xf32, #tpu.memory_space<vmem>>, %arg9: memref<1x3x1xf32, #tpu.memory_space<vmem>>, %arg10: memref<1x16x1xf32, #tpu.memory_space<vmem>>, %arg11: memref<8x1xf32, #tpu.memory_space<vmem>>) attributes {dimension_semantics = [#tpu.dimension_semantics<parallel>, #tpu.dimension_semantics<arbitrary>], iteration_bounds = array<i64: 2, 1>, scalar_prefetch = 0 : i64, scratch_operands = 1 : i64, tpu.core_type = #tpu.core_type<tc>, window_params = [{transform_indices = @transform_0, window_bounds = array<i64: 1, 8, 256>}, {transform_indices = @transform_1, window_bounds = array<i64: 1, 16, 1>}, {pipeline_mode = #tpu.pipeline_mode<synchronous>, transform_indices = @transform_2, window_bounds = array<i64: 16, 8>}, {pipeline_mode = #tpu.pipeline_mode<synchronous>, transform_indices = @transform_3, window_bounds = array<i64: 16, 16>}, {pipeline_mode = #tpu.pipeline_mode<synchronous>, transform_indices = @transform_4, window_bounds = array<i64: 16, 1>}, {pipeline_mode = #tpu.pipeline_mode<synchronous>, transform_indices = @transform_5, window_bounds = array<i64: 3, 16>}, {pipeline_mode = #tpu.pipeline_mode<synchronous>, transform_indices = @transform_6, window_bounds = array<i64: 3, 1>}, {transform_indices = @transform_7, window_bounds = array<i64: 1, 3, 1>}, {transform_indices = @transform_8, window_bounds = array<i64: 1, 16, 1>}]} {
    %c0_i32 = arith.constant 0 : i32
    %0 = arith.cmpi eq, %arg1, %c0_i32 : i32
    %1 = arith.extui %0 : i1 to i32
    %c0_i32_0 = arith.constant 0 : i32
    %2 = arith.cmpi ne, %1, %c0_i32_0 : i32
    scf.if %2 {
      %cst_10 = arith.constant 0.000000e+00 : f32
      %13 = vector.broadcast %cst_10 : f32 to vector<8x1xf32>
      %c0_11 = arith.constant 0 : index
      %c0_12 = arith.constant 0 : index
      %14 = vector.load %arg11[%c0_11, %c0_12] : memref<8x1xf32, #tpu.memory_space<vmem>>, vector<8x1xf32>
      tpu.vector_store %arg11[%c0_11, %c0_12], %13 {strides = array<i32>} : memref<8x1xf32, #tpu.memory_space<vmem>>, vector<8x1xf32>,
    } else {
    }
    %c0 = arith.constant 0 : index
    %c0_1 = arith.constant 0 : index
    %c0_2 = arith.constant 0 : index
    %3 = vector.load %arg2[%c0, %c0_1, %c0_2] : memref<1x8x256xf32, #tpu.memory_space<vmem>>, vector<1x8x256xf32>
    %4 = vector.shape_cast %3 : vector<1x8x256xf32> to vector<8x256xf32>
    %cst = arith.constant 1.000000e+00 : f32
    %5 = vector.broadcast %cst : f32 to vector<256x1xf32>
    %c0_3 = arith.constant 0 : index
    %c0_4 = arith.constant 0 : index
    %6 = vector.load %arg11[%c0_3, %c0_4] : memref<8x1xf32, #tpu.memory_space<vmem>>, vector<8x1xf32>
    %cst_5 = arith.constant dense<0.000000e+00> : vector<8x1xf32>
    %7 = tpu.matmul %4, %5, %cst_5 {dimension_numbers = #tpu.dot_dimension_numbers<[1], [0], [0], [1], [0, 0, 1, 1], [], []>} : vector<8x256xf32>, vector<256x1xf32>, vector<8x1xf32> -> vector<8x1xf32>
    %8 = arith.addf %6, %7 : vector<8x1xf32>
    %c0_6 = arith.constant 0 : index
    %c0_7 = arith.constant 0 : index
    %9 = vector.load %arg11[%c0_6, %c0_7] : memref<8x1xf32, #tpu.memory_space<vmem>>, vector<8x1xf32>
    tpu.vector_store %arg11[%c0_6, %c0_7], %8 {strides = array<i32>} : memref<8x1xf32, #tpu.memory_space<vmem>>, vector<8x1xf32>,
    %c0_i32_8 = arith.constant 0 : i32
    %10 = arith.cmpi eq, %arg1, %c0_i32_8 : i32
    %11 = arith.extui %10 : i1 to i32
    %c0_i32_9 = arith.constant 0 : i32
    %12 = arith.cmpi ne, %11, %c0_i32_9 : i32
    scf.if %12 {
      %c0_10 = arith.constant 0 : index
      %c0_11 = arith.constant 0 : index
      %13 = vector.load %arg11[%c0_10, %c0_11] : memref<8x1xf32, #tpu.memory_space<vmem>>, vector<8x1xf32>
      %cst_12 = arith.constant 3.906250e-03 : f32
      %14 = vector.broadcast %cst_12 : f32 to vector<8x1xf32>
      %15 = arith.mulf %13, %14 : vector<8x1xf32>
      %c0_13 = arith.constant 0 : index
      %c0_14 = arith.constant 0 : index
      %16 = vector.load %arg4[%c0_13, %c0_14] : memref<16x8xf32, #tpu.memory_space<vmem>>, vector<16x8xf32>
      %cst_15 = arith.constant dense<0.000000e+00> : vector<16x1xf32>
      %17 = tpu.matmul %16, %15, %cst_15 {dimension_numbers = #tpu.dot_dimension_numbers<[1], [0], [0], [1], [0, 0, 1, 1], [], []>} : vector<16x8xf32>, vector<8x1xf32>, vector<16x1xf32> -> vector<16x1xf32>
      %c0_16 = arith.constant 0 : index
      %c0_17 = arith.constant 0 : index
      %18 = vector.load %arg5[%c0_16, %c0_17] : memref<16x16xf32, #tpu.memory_space<vmem>>, vector<16x16xf32>
      %c0_18 = arith.constant 0 : index
      %c0_19 = arith.constant 0 : index
      %c0_20 = arith.constant 0 : index
      %19 = vector.load %arg3[%c0_18, %c0_19, %c0_20] : memref<1x16x1xf32, #tpu.memory_space<vmem>>, vector<1x16x1xf32>
      %20 = vector.shape_cast %19 : vector<1x16x1xf32> to vector<16x1xf32>
      %cst_21 = arith.constant dense<0.000000e+00> : vector<16x1xf32>
      %21 = tpu.matmul %18, %20, %cst_21 {dimension_numbers = #tpu.dot_dimension_numbers<[1], [0], [0], [1], [0, 0, 1, 1], [], []>} : vector<16x16xf32>, vector<16x1xf32>, vector<16x1xf32> -> vector<16x1xf32>
      %22 = arith.addf %17, %21 : vector<16x1xf32>
      %c0_22 = arith.constant 0 : index
      %c0_23 = arith.constant 0 : index
      %23 = vector.load %arg6[%c0_22, %c0_23] : memref<16x1xf32, #tpu.memory_space<vmem>>, vector<16x1xf32>
      %24 = arith.addf %22, %23 : vector<16x1xf32>
      %cst_24 = arith.constant 5.000000e-01 : f32
      %25 = vector.broadcast %cst_24 : f32 to vector<16x1xf32>
      %26 = arith.mulf %25, %24 : vector<16x1xf32>
      %cst_25 = arith.constant 4.471500e-02 : f32
      %27 = vector.broadcast %cst_25 : f32 to vector<16x1xf32>
      %28 = arith.mulf %27, %24 : vector<16x1xf32>
      %29 = arith.mulf %28, %24 : vector<16x1xf32>
      %30 = arith.mulf %29, %24 : vector<16x1xf32>
      %31 = arith.addf %24, %30 : vector<16x1xf32>
      %cst_26 = arith.constant 0.797884583 : f32
      %32 = vector.broadcast %cst_26 : f32 to vector<16x1xf32>
      %33 = arith.mulf %32, %31 : vector<16x1xf32>
      %34 = math.tanh %33 : vector<16x1xf32>
      %cst_27 = arith.constant 1.000000e+00 : f32
      %35 = vector.broadcast %cst_27 : f32 to vector<16x1xf32>
      %36 = arith.addf %35, %34 : vector<16x1xf32>
      %37 = arith.mulf %26, %36 : vector<16x1xf32>
      %c0_28 = arith.constant 0 : index
      %c0_29 = arith.constant 0 : index
      %38 = vector.load %arg7[%c0_28, %c0_29] : memref<3x16xf32, #tpu.memory_space<vmem>>, vector<3x16xf32>
      %cst_30 = arith.constant dense<0.000000e+00> : vector<3x1xf32>
      %39 = tpu.matmul %38, %37, %cst_30 {dimension_numbers = #tpu.dot_dimension_numbers<[1], [0], [0], [1], [0, 0, 1, 1], [], []>} : vector<3x16xf32>, vector<16x1xf32>, vector<3x1xf32> -> vector<3x1xf32>
      %c0_31 = arith.constant 0 : index
      %c0_32 = arith.constant 0 : index
      %40 = vector.load %arg8[%c0_31, %c0_32] : memref<3x1xf32, #tpu.memory_space<vmem>>, vector<3x1xf32>
      %41 = arith.addf %39, %40 : vector<3x1xf32>
      %cst_33 = arith.constant 0.000000e+00 : f32
      %42 = vector.broadcast %cst_33 : f32 to vector<3x1xf32>
      %43 = arith.maximumf %41, %42 : vector<3x1xf32>
      %c0_34 = arith.constant 0 : index
      %c0_35 = arith.constant 0 : index
      %c0_36 = arith.constant 0 : index
      %44 = vector.load %arg9[%c0_34, %c0_35, %c0_36] : memref<1x3x1xf32, #tpu.memory_space<vmem>>, vector<1x3x1xf32>
      %45 = vector.shape_cast %44 : vector<1x3x1xf32> to vector<3x1xf32>
      %46 = vector.shape_cast %43 : vector<3x1xf32> to vector<1x3x1xf32>
      tpu.vector_store %arg9[%c0_34, %c0_35, %c0_36], %46 {strides = array<i32>} : memref<1x3x1xf32, #tpu.memory_space<vmem>>, vector<1x3x1xf32>,
      %c0_37 = arith.constant 0 : index
      %c0_38 = arith.constant 0 : index
      %c0_39 = arith.constant 0 : index
      %47 = vector.load %arg10[%c0_37, %c0_38, %c0_39] : memref<1x16x1xf32, #tpu.memory_space<vmem>>, vector<1x16x1xf32>
      %48 = vector.shape_cast %47 : vector<1x16x1xf32> to vector<16x1xf32>
      %49 = vector.shape_cast %37 : vector<16x1xf32> to vector<1x16x1xf32>
      tpu.vector_store %arg10[%c0_37, %c0_38, %c0_39], %49 {strides = array<i32>} : memref<1x16x1xf32, #tpu.memory_space<vmem>>, vector<1x16x1xf32>,
    } else {
    }
    return
  }
  func.func @transform_0(%arg0: i32, %arg1: i32) -> (i32, i32, i32) {
    %c0_i32 = arith.constant 0 : i32
    %c0_i32_0 = arith.constant 0 : i32
    return %arg0, %c0_i32, %arg1 : i32, i32, i32
  }
  func.func @transform_1(%arg0: i32, %arg1: i32) -> (i32, i32, i32) {
    %c0_i32 = arith.constant 0 : i32
    %c0_i32_0 = arith.constant 0 : i32
    %c0_i32_1 = arith.constant 0 : i32
    return %arg0, %c0_i32, %c0_i32_0 : i32, i32, i32
  }
  func.func @transform_2(%arg0: i32, %arg1: i32) -> (i32, i32) {
    %c0_i32 = arith.constant 0 : i32
    %c0_i32_0 = arith.constant 0 : i32
    %c0_i32_1 = arith.constant 0 : i32
    return %c0_i32, %c0_i32_0 : i32, i32
  }
  func.func @transform_3(%arg0: i32, %arg1: i32) -> (i32, i32) {
    %c0_i32 = arith.constant 0 : i32
    %c0_i32_0 = arith.constant 0 : i32
    %c0_i32_1 = arith.constant 0 : i32
    return %c0_i32, %c0_i32_0 : i32, i32
  }
  func.func @transform_4(%arg0: i32, %arg1: i32) -> (i32, i32) {
    %c0_i32 = arith.constant 0 : i32
    %c0_i32_0 = arith.constant 0 : i32
    %c0_i32_1 = arith.constant 0 : i32
    return %c0_i32, %c0_i32_0 : i32, i32
  }
  func.func @transform_5(%arg0: i32, %arg1: i32) -> (i32, i32) {
    %c0_i32 = arith.constant 0 : i32
    %c0_i32_0 = arith.constant 0 : i32
    %c0_i32_1 = arith.constant 0 : i32
    return %c0_i32, %c0_i32_0 : i32, i32
  }
  func.func @transform_6(%arg0: i32, %arg1: i32) -> (i32, i32) {
    %c0_i32 = arith.constant 0 : i32
    %c0_i32_0 = arith.constant 0 : i32
    %c0_i32_1 = arith.constant 0 : i32
    return %c0_i32, %c0_i32_0 : i32, i32
  }
  func.func @transform_7(%arg0: i32, %arg1: i32) -> (i32, i32, i32) {
    %c0_i32 = arith.constant 0 : i32
    %c0_i32_0 = arith.constant 0 : i32
    %c0_i32_1 = arith.constant 0 : i32
    return %arg0, %c0_i32, %c0_i32_0 : i32, i32, i32
  }
  func.func @transform_8(%arg0: i32, %arg1: i32) -> (i32, i32, i32) {
    %c0_i32 = arith.constant 0 : i32
    %c0_i32_0 = arith.constant 0 : i32
    %c0_i32_1 = arith.constant 0 : i32
    return %arg0, %c0_i32, %c0_i32_0 : i32, i32, i32
  }
}

module attributes {stable_mosaic.version = 11 : i64} {
  func.func @_expert_bank_kernel(%arg0: i32, %arg1: i32, %arg2: memref<1x8x256xf32, #tpu.memory_space<vmem>>, %arg3: memref<56x8xf32, #tpu.memory_space<vmem>>, %arg4: memref<56x1xf32, #tpu.memory_space<vmem>>, %arg5: memref<8x56xf32, #tpu.memory_space<vmem>>, %arg6: memref<1x56x1xf32, #tpu.memory_space<vmem>>, %arg7: memref<1x8x1xf32, #tpu.memory_space<vmem>>, %arg8: memref<1x8x256xf32, #tpu.memory_space<vmem>>) attributes {dimension_semantics = [#tpu.dimension_semantics<parallel>, #tpu.dimension_semantics<parallel>], iteration_bounds = array<i64: 2, 1>, scalar_prefetch = 0 : i64, scratch_operands = 0 : i64, tpu.core_type = #tpu.core_type<tc>, window_params = [{transform_indices = @transform_0, window_bounds = array<i64: 1, 8, 256>}, {pipeline_mode = #tpu.pipeline_mode<synchronous>, transform_indices = @transform_1, window_bounds = array<i64: 56, 8>}, {pipeline_mode = #tpu.pipeline_mode<synchronous>, transform_indices = @transform_2, window_bounds = array<i64: 56, 1>}, {pipeline_mode = #tpu.pipeline_mode<synchronous>, transform_indices = @transform_3, window_bounds = array<i64: 8, 56>}, {transform_indices = @transform_4, window_bounds = array<i64: 1, 56, 1>}, {transform_indices = @transform_5, window_bounds = array<i64: 1, 8, 1>}, {transform_indices = @transform_6, window_bounds = array<i64: 1, 8, 256>}]} {
    %c0 = arith.constant 0 : index
    %c0_0 = arith.constant 0 : index
    %c0_1 = arith.constant 0 : index
    %0 = vector.load %arg2[%c0, %c0_0, %c0_1] : memref<1x8x256xf32, #tpu.memory_space<vmem>>, vector<1x8x256xf32>
    %1 = vector.shape_cast %0 : vector<1x8x256xf32> to vector<8x256xf32>
    %2 = arith.truncf %1 : vector<8x256xf32> to vector<8x256xbf16>
    %c0_2 = arith.constant 0 : index
    %c0_3 = arith.constant 0 : index
    %3 = vector.load %arg3[%c0_2, %c0_3] : memref<56x8xf32, #tpu.memory_space<vmem>>, vector<56x8xf32>
    %4 = arith.truncf %3 : vector<56x8xf32> to vector<56x8xbf16>
    %cst = arith.constant dense<0.000000e+00> : vector<56x256xf32>
    %5 = tpu.matmul %4, %2, %cst {dimension_numbers = #tpu.dot_dimension_numbers<[1], [0], [0], [1], [0, 0, 1, 1], [], []>} : vector<56x8xbf16>, vector<8x256xbf16>, vector<56x256xf32> -> vector<56x256xf32>
    %c0_4 = arith.constant 0 : index
    %c0_5 = arith.constant 0 : index
    %6 = vector.load %arg4[%c0_4, %c0_5] : memref<56x1xf32, #tpu.memory_space<vmem>>, vector<56x1xf32>
    %7 = vector.broadcast %6 : vector<56x1xf32> to vector<56x256xf32>
    %8 = arith.addf %5, %7 : vector<56x256xf32>
    %cst_6 = arith.constant 5.000000e-01 : f32
    %9 = vector.broadcast %cst_6 : f32 to vector<56x256xf32>
    %10 = arith.mulf %9, %8 : vector<56x256xf32>
    %cst_7 = arith.constant 4.471500e-02 : f32
    %11 = vector.broadcast %cst_7 : f32 to vector<56x256xf32>
    %12 = arith.mulf %11, %8 : vector<56x256xf32>
    %13 = arith.mulf %12, %8 : vector<56x256xf32>
    %14 = arith.mulf %13, %8 : vector<56x256xf32>
    %15 = arith.addf %8, %14 : vector<56x256xf32>
    %cst_8 = arith.constant 0.797884583 : f32
    %16 = vector.broadcast %cst_8 : f32 to vector<56x256xf32>
    %17 = arith.mulf %16, %15 : vector<56x256xf32>
    %18 = math.tanh %17 : vector<56x256xf32>
    %cst_9 = arith.constant 1.000000e+00 : f32
    %19 = vector.broadcast %cst_9 : f32 to vector<56x256xf32>
    %20 = arith.addf %19, %18 : vector<56x256xf32>
    %21 = arith.mulf %10, %20 : vector<56x256xf32>
    %c0_10 = arith.constant 0 : index
    %c0_11 = arith.constant 0 : index
    %c0_12 = arith.constant 0 : index
    %22 = vector.load %arg6[%c0_10, %c0_11, %c0_12] : memref<1x56x1xf32, #tpu.memory_space<vmem>>, vector<1x56x1xf32>
    %23 = vector.shape_cast %22 : vector<1x56x1xf32> to vector<56x1xf32>
    %24 = vector.broadcast %23 : vector<56x1xf32> to vector<56x256xf32>
    %25 = arith.mulf %21, %24 : vector<56x256xf32>
    %26 = arith.truncf %25 : vector<56x256xf32> to vector<56x256xbf16>
    %c0_13 = arith.constant 0 : index
    %c0_14 = arith.constant 0 : index
    %27 = vector.load %arg5[%c0_13, %c0_14] : memref<8x56xf32, #tpu.memory_space<vmem>>, vector<8x56xf32>
    %28 = arith.truncf %27 : vector<8x56xf32> to vector<8x56xbf16>
    %cst_15 = arith.constant dense<0.000000e+00> : vector<8x256xf32>
    %29 = tpu.matmul %28, %26, %cst_15 {dimension_numbers = #tpu.dot_dimension_numbers<[1], [0], [0], [1], [0, 0, 1, 1], [], []>} : vector<8x56xbf16>, vector<56x256xbf16>, vector<8x256xf32> -> vector<8x256xf32>
    %c0_16 = arith.constant 0 : index
    %c0_17 = arith.constant 0 : index
    %c0_18 = arith.constant 0 : index
    %30 = vector.load %arg7[%c0_16, %c0_17, %c0_18] : memref<1x8x1xf32, #tpu.memory_space<vmem>>, vector<1x8x1xf32>
    %31 = vector.shape_cast %30 : vector<1x8x1xf32> to vector<8x1xf32>
    %32 = vector.broadcast %31 : vector<8x1xf32> to vector<8x256xf32>
    %33 = arith.addf %29, %32 : vector<8x256xf32>
    %c0_19 = arith.constant 0 : index
    %c0_20 = arith.constant 0 : index
    %c0_21 = arith.constant 0 : index
    %34 = vector.load %arg8[%c0_19, %c0_20, %c0_21] : memref<1x8x256xf32, #tpu.memory_space<vmem>>, vector<1x8x256xf32>
    %35 = vector.shape_cast %34 : vector<1x8x256xf32> to vector<8x256xf32>
    %36 = vector.shape_cast %33 : vector<8x256xf32> to vector<1x8x256xf32>
    tpu.vector_store %arg8[%c0_19, %c0_20, %c0_21], %36 {strides = array<i32>} : memref<1x8x256xf32, #tpu.memory_space<vmem>>, vector<1x8x256xf32>,
    return
  }
  func.func @transform_0(%arg0: i32, %arg1: i32) -> (i32, i32, i32) {
    %c0_i32 = arith.constant 0 : i32
    %c0_i32_0 = arith.constant 0 : i32
    return %arg0, %c0_i32, %arg1 : i32, i32, i32
  }
  func.func @transform_1(%arg0: i32, %arg1: i32) -> (i32, i32) {
    %c0_i32 = arith.constant 0 : i32
    %c0_i32_0 = arith.constant 0 : i32
    %c0_i32_1 = arith.constant 0 : i32
    return %c0_i32, %c0_i32_0 : i32, i32
  }
  func.func @transform_2(%arg0: i32, %arg1: i32) -> (i32, i32) {
    %c0_i32 = arith.constant 0 : i32
    %c0_i32_0 = arith.constant 0 : i32
    %c0_i32_1 = arith.constant 0 : i32
    return %c0_i32, %c0_i32_0 : i32, i32
  }
  func.func @transform_3(%arg0: i32, %arg1: i32) -> (i32, i32) {
    %c0_i32 = arith.constant 0 : i32
    %c0_i32_0 = arith.constant 0 : i32
    %c0_i32_1 = arith.constant 0 : i32
    return %c0_i32, %c0_i32_0 : i32, i32
  }
  func.func @transform_4(%arg0: i32, %arg1: i32) -> (i32, i32, i32) {
    %c0_i32 = arith.constant 0 : i32
    %c0_i32_0 = arith.constant 0 : i32
    %c0_i32_1 = arith.constant 0 : i32
    return %arg0, %c0_i32, %c0_i32_0 : i32, i32, i32
  }
  func.func @transform_5(%arg0: i32, %arg1: i32) -> (i32, i32, i32) {
    %c0_i32 = arith.constant 0 : i32
    %c0_i32_0 = arith.constant 0 : i32
    %c0_i32_1 = arith.constant 0 : i32
    return %arg0, %c0_i32, %c0_i32_0 : i32, i32, i32
  }
  func.func @transform_6(%arg0: i32, %arg1: i32) -> (i32, i32, i32) {
    %c0_i32 = arith.constant 0 : i32
    %c0_i32_0 = arith.constant 0 : i32
    return %arg0, %c0_i32, %arg1 : i32, i32, i32
  }
}

</mosaic_0001>

<llo_original>
// kernel: _forward_impl.2
$region0: #{_forward_impl.2}
  #allocation0 [shape = 'u32[]', space=smem, size = 0x4, offset = 0x4, fixed_abs, tag = 'smem constant byte address 0x4 - core index']
  #allocation1 [shape = 'u32[144,128]{1,0:T(1,128)}', space=vmem, size = 0x12000, scoped, tag = 'internal scratch']
  #allocation2 [shape = 'f32[8,1]{1,0:T(8,128)}', space=vmem, size = 0x1000, scoped, tag = 'scratch operand']
  %s0 = inlined_call_operand.vmem [shape: f32[2,8,256], index: 0, kind: input, shape index: {}]
  %s1 = inlined_call_operand.vmem [shape: f32[2,16,1], index: 1, kind: input, shape index: {}]
  %s2 = inlined_call_operand.vmem [shape: f32[16,8], index: 2, kind: input, shape index: {}]
  %s3 = inlined_call_operand.vmem [shape: f32[16,16], index: 3, kind: input, shape index: {}]
  %s4 = inlined_call_operand.vmem [shape: f32[16,1], index: 4, kind: input, shape index: {}]
  %s5 = inlined_call_operand.vmem [shape: f32[3,16], index: 5, kind: input, shape index: {}]
  %s6 = inlined_call_operand.vmem [shape: f32[3,1], index: 6, kind: input, shape index: {}]
  %s7 = inlined_call_operand.vmem [shape: f32[2,3,1], index: 7, kind: output, shape index: {0}]
  %s8 = inlined_call_operand.vmem [shape: f32[2,16,1], index: 8, kind: output, shape index: {1}]
  %9 = xla_tuple %s7, %s8
  %s10 = sld [smem:[#allocation0]]
  $region77: #{_forward_impl.2} parent=0
    _
  %s12 = ssub.s32 1, %s10
  %s13 = scalar_select 0, %s12, %s10
  loop: start=0, step=1, limit=4
  $region2: #{_forward_impl.2} parent=0 // loop_pre_header
    _
  $region3: #{_forward_impl.2} parent=0 // loop_header
    %s15 = sphi 0, %s19
    %p16 = scmp.ge.s32.totalorder %s15, 4
    %s22 = sphi 0, %s34
    %s23 = sphi 0, %s30
    %s24 = sphi 0, %s22
    %s25 = sphi 0, %s23
    %s26 = sphi 0, %s24
    %s27 = sphi 0, %s25
    %s39 = sphi 0, %s41
    %s42 = sphi 0, %s39
    %s43 = sphi 0, %s42
    %s59 = sphi 0, %s43
    %s65 = sphi 0, %s67
    %s68 = sphi 0, %s65
    %s69 = sphi 0, %s68
    %s85 = sphi 0, %s69
    %s89 = sphi 0, %s89
    %s91 = sphi 0, %s89
    %s92 = sphi 0, %s91
    %s106 = sphi 0, %s92
    %s110 = sphi 0, %s110
    %s112 = sphi 0, %s110
    %s113 = sphi 0, %s112
    %s127 = sphi 0, %s113
    %s131 = sphi 0, %s131
    %s133 = sphi 0, %s131
    %s134 = sphi 0, %s133
    %s148 = sphi 0, %s134
    %s152 = sphi 0, %s152
    %s154 = sphi 0, %s152
    %s155 = sphi 0, %s154
    %s169 = sphi 0, %s155
    %s173 = sphi 0, %s173
    %s175 = sphi 0, %s173
    %s176 = sphi 0, %s175
    %s190 = sphi 0, %s176
    %s196 = sphi 0, %s198
    %s199 = sphi 0, %s196
    %s200 = sphi 0, %s199
    %s216 = sphi 0, %s200
    %s222 = sphi 0, %s224
    %s225 = sphi 0, %s222
    %s226 = sphi 0, %s225
    %s242 = sphi 0, %s226
  $region4: #{_forward_impl.2} parent=0 // loop_header_branch
    %18 = sbr.rel (%p16) target = $region8
  $region5: #{_forward_impl.2} parent=0 // loop_body
    %s20 = ssub.s32 %s15, 1
    %s21 = ssub.s32 %s15, 2
    %s28 = sadd.s32 1, %s23
    %p29 = scmp.ge.s32.totalorder %s28, 1
    %s30 = scalar_select %p29, 0, %s28
    %s31 = sadd.s32 1, %s22
    %s32 = scalar_select %p29, %s31, %s22
    %p33 = scmp.ge.s32.totalorder %s32, 2
    %s34 = scalar_select %p33, 0, %s32
    %s35 = ssub.s32 %s22, %s34
    %s36 = ssub.s32 %s23, %s30
    %s37 = sor.u32 %s35, %s36
    %p38 = scmp.eq.s32.totalorder %s37, 0
    %s40 = sadd.s32 %s39, 1
    %s41 = scalar_select %p38, %s39, %s40
    %p44 = pneg %p38
    %p45 = scmp.eq.s32.totalorder %s15, 1
    %p46 = por %p44, %p45
    %p47 = scmp.ne.s32.totalorder %s39, %s42
    %p48 = scmp.eq.s32.totalorder %s15, 0
    %p49 = por %p47, %p48
    %p50 = scmp.ne.s32.totalorder %s39, %s42
    %p51 = scmp.eq.s32.totalorder %s20, 1
    %p52 = por %p50, %p51
    %p53 = scmp.ne.s32.totalorder %s42, %s43
    %p54 = scmp.eq.s32.totalorder %s20, 0
    %p55 = por %p53, %p54
    %p56 = scmp.ne.s32.totalorder %s42, %s43
    %p57 = scmp.eq.s32.totalorder %s21, 1
    %p58 = por %p56, %p57
    %p60 = scmp.ne.s32.totalorder %s43, %s59
    %p61 = scmp.eq.s32.totalorder %s21, 0
    %p62 = por %p60, %p61
    %s63 = ssub.s32 %s22, %s34
    %p64 = scmp.eq.s32.totalorder %s63, 0
    %s66 = sadd.s32 %s65, 1
    %s67 = scalar_select %p64, %s65, %s66
    %p70 = pneg %p64
    %p71 = scmp.eq.s32.totalorder %s15, 1
    %p72 = por %p70, %p71
    %p73 = scmp.ne.s32.totalorder %s65, %s68
    %p74 = scmp.eq.s32.totalorder %s15, 0
    %p75 = por %p73, %p74
    %p76 = scmp.ne.s32.totalorder %s65, %s68
    %p77 = scmp.eq.s32.totalorder %s20, 1
    %p78 = por %p76, %p77
    %p79 = scmp.ne.s32.totalorder %s68, %s69
    %p80 = scmp.eq.s32.totalorder %s20, 0
    %p81 = por %p79, %p80
    %p82 = scmp.ne.s32.totalorder %s68, %s69
    %p83 = scmp.eq.s32.totalorder %s21, 1
    %p84 = por %p82, %p83
    %p86 = scmp.ne.s32.totalorder %s69, %s85
    %p87 = scmp.eq.s32.totalorder %s21, 0
    %p88 = por %p86, %p87
    %s90 = sadd.s32 %s89, 1
    %p93 = scmp.eq.s32.totalorder %s15, 1
    %p94 = scmp.ne.s32.totalorder %s89, %s91
    %p95 = scmp.eq.s32.totalorder %s15, 0
    %p96 = por %p94, %p95
    %p97 = scmp.ne.s32.totalorder %s89, %s91
    %p98 = scmp.eq.s32.totalorder %s20, 1
    %p99 = por %p97, %p98
    %p100 = scmp.ne.s32.totalorder %s91, %s92
    %p101 = scmp.eq.s32.totalorder %s20, 0
    %p102 = por %p100, %p101
    %p103 = scmp.ne.s32.totalorder %s91, %s92
    %p104 = scmp.eq.s32.totalorder %s21, 1
    %p105 = por %p103, %p104
    %p107 = scmp.ne.s32.totalorder %s92, %s106
    %p108 = scmp.eq.s32.totalorder %s21, 0
    %p109 = por %p107, %p108
    %s111 = sadd.s32 %s110, 1
    %p114 = scmp.eq.s32.totalorder %s15, 1
    %p115 = scmp.ne.s32.totalorder %s110, %s112
    %p116 = scmp.eq.s32.totalorder %s15, 0
    %p117 = por %p115, %p116
    %p118 = scmp.ne.s32.totalorder %s110, %s112
    %p119 = scmp.eq.s32.totalorder %s20, 1
    %p120 = por %p118, %p119
    %p121 = scmp.ne.s32.totalorder %s112, %s113
    %p122 = scmp.eq.s32.totalorder %s20, 0
    %p123 = por %p121, %p122
    %p124 = scmp.ne.s32.totalorder %s112, %s113
    %p125 = scmp.eq.s32.totalorder %s21, 1
    %p126 = por %p124, %p125
    %p128 = scmp.ne.s32.totalorder %s113, %s127
    %p129 = scmp.eq.s32.totalorder %s21, 0
    %p130 = por %p128, %p129
    %s132 = sadd.s32 %s131, 1
    %p135 = scmp.eq.s32.totalorder %s15, 1
    %p136 = scmp.ne.s32.totalorder %s131, %s133
    %p137 = scmp.eq.s32.totalorder %s15, 0
    %p138 = por %p136, %p137
    %p139 = scmp.ne.s32.totalorder %s131, %s133
    %p140 = scmp.eq.s32.totalorder %s20, 1
    %p141 = por %p139, %p140
    %p142 = scmp.ne.s32.totalorder %s133, %s134
    %p143 = scmp.eq.s32.totalorder %s20, 0
    %p144 = por %p142, %p143
    %p145 = scmp.ne.s32.totalorder %s133, %s134
    %p146 = scmp.eq.s32.totalorder %s21, 1
    %p147 = por %p145, %p146
    %p149 = scmp.ne.s32.totalorder %s134, %s148
    %p150 = scmp.eq.s32.totalorder %s21, 0
    %p151 = por %p149, %p150
    %s153 = sadd.s32 %s152, 1
    %p156 = scmp.eq.s32.totalorder %s15, 1
    %p157 = scmp.ne.s32.totalorder %s152, %s154
    %p158 = scmp.eq.s32.totalorder %s15, 0
    %p159 = por %p157, %p158
    %p160 = scmp.ne.s32.totalorder %s152, %s154
    %p161 = scmp.eq.s32.totalorder %s20, 1
    %p162 = por %p160, %p161
    %p163 = scmp.ne.s32.totalorder %s154, %s155
    %p164 = scmp.eq.s32.totalorder %s20, 0
    %p165 = por %p163, %p164
    %p166 = scmp.ne.s32.totalorder %s154, %s155
    %p167 = scmp.eq.s32.totalorder %s21, 1
    %p168 = por %p166, %p167
    %p170 = scmp.ne.s32.totalorder %s155, %s169
    %p171 = scmp.eq.s32.totalorder %s21, 0
    %p172 = por %p170, %p171
    %s174 = sadd.s32 %s173, 1
    %p177 = scmp.eq.s32.totalorder %s15, 1
    %p178 = scmp.ne.s32.totalorder %s173, %s175
    %p179 = scmp.eq.s32.totalorder %s15, 0
    %p180 = por %p178, %p179
    %p181 = scmp.ne.s32.totalorder %s173, %s175
    %p182 = scmp.eq.s32.totalorder %s20, 1
    %p183 = por %p181, %p182
    %p184 = scmp.ne.s32.totalorder %s175, %s176
    %p185 = scmp.eq.s32.totalorder %s20, 0
    %p186 = por %p184, %p185
    %p187 = scmp.ne.s32.totalorder %s175, %s176
    %p188 = scmp.eq.s32.totalorder %s21, 1
    %p189 = por %p187, %p188
    %p191 = scmp.ne.s32.totalorder %s176, %s190
    %p192 = scmp.eq.s32.totalorder %s21, 0
    %p193 = por %p191, %p192
    %s194 = ssub.s32 %s22, %s34
    %p195 = scmp.eq.s32.totalorder %s194, 0
    %s197 = sadd.s32 %s196, 1
    %s198 = scalar_select %p195, %s196, %s197
    %p201 = pneg %p195
    %p202 = scmp.eq.s32.totalorder %s15, 1
    %p203 = por %p201, %p202
    %p204 = scmp.ne.s32.totalorder %s196, %s199
    %p205 = scmp.eq.s32.totalorder %s15, 0
    %p206 = por %p204, %p205
    %p207 = scmp.ne.s32.totalorder %s196, %s199
    %p208 = scmp.eq.s32.totalorder %s20, 1
    %p209 = por %p207, %p208
    %p210 = scmp.ne.s32.totalorder %s199, %s200
    %p211 = scmp.eq.s32.totalorder %s20, 0
    %p212 = por %p210, %p211
    %p213 = scmp.ne.s32.totalorder %s199, %s200
    %p214 = scmp.eq.s32.totalorder %s21, 1
    %p215 = por %p213, %p214
    %p217 = scmp.ne.s32.totalorder %s200, %s216
    %p218 = scmp.eq.s32.totalorder %s21, 0
    %p219 = por %p217, %p218
    %s220 = ssub.s32 %s22, %s34
    %p221 = scmp.eq.s32.totalorder %s220, 0
    %s223 = sadd.s32 %s222, 1
    %s224 = scalar_select %p221, %s222, %s223
    %p227 = pneg %p221
    %p228 = scmp.eq.s32.totalorder %s15, 1
    %p229 = por %p227, %p228
    %p230 = scmp.ne.s32.totalorder %s222, %s225
    %p231 = scmp.eq.s32.totalorder %s15, 0
    %p232 = por %p230, %p231
    %p233 = scmp.ne.s32.totalorder %s222, %s225
    %p234 = scmp.eq.s32.totalorder %s20, 1
    %p235 = por %p233, %p234
    %p236 = scmp.ne.s32.totalorder %s225, %s226
    %p237 = scmp.eq.s32.totalorder %s20, 0
    %p238 = por %p236, %p237
    %p239 = scmp.ne.s32.totalorder %s225, %s226
    %p240 = scmp.eq.s32.totalorder %s21, 1
    %p241 = por %p239, %p240
    %p243 = scmp.ne.s32.totalorder %s226, %s242
    %p244 = scmp.eq.s32.totalorder %s21, 0
    %p245 = por %p243, %p244
    %p246 = scmp.le.s32.totalorder 1, %s15
    %p247 = scmp.lt.s32.totalorder %s15, 3
    %p248 = pnand %p246, %p247
    %p249 = pneg %p248
    // Predicated region
    $region9: #{_forward_impl.2} parent=5 // pred_check
      _
    $region10: #{_forward_impl.2} parent=5 // pred_check_branch
      %251 = sbr.rel (%p248) target = $region12
    $region11: #{_forward_impl.2} parent=5 // pred_region
      %s252 = ssub.s32 %s15, 1
      // Predicated region
      $region13: #{_forward_impl.2} parent=11 // pred_check
        %p253 = pneg %p102
      $region14: #{_forward_impl.2} parent=11 // pred_check_branch
        %255 = sbr.rel (%p253) target = $region16
      $region15: #{_forward_impl.2} parent=11 // pred_region
        _
      $region16: #{_forward_impl.2} parent=11 // pred_fallthru
        _
      // Predicated region
      $region17: #{_forward_impl.2} parent=11 // pred_check
        %p256 = pneg %p123
      $region18: #{_forward_impl.2} parent=11 // pred_check_branch
        %258 = sbr.rel (%p256) target = $region20
      $region19: #{_forward_impl.2} parent=11 // pred_region
        _
      $region20: #{_forward_impl.2} parent=11 // pred_fallthru
        _
      // Predicated region
      $region21: #{_forward_impl.2} parent=11 // pred_check
        %p259 = pneg %p144
      $region22: #{_forward_impl.2} parent=11 // pred_check_branch
        %261 = sbr.rel (%p259) target = $region24
      $region23: #{_forward_impl.2} parent=11 // pred_region
        _
      $region24: #{_forward_impl.2} parent=11 // pred_fallthru
        _
      // Predicated region
      $region25: #{_forward_impl.2} parent=11 // pred_check
        %p262 = pneg %p165
      $region26: #{_forward_impl.2} parent=11 // pred_check_branch
        %264 = sbr.rel (%p262) target = $region28
      $region27: #{_forward_impl.2} parent=11 // pred_region
        _
      $region28: #{_forward_impl.2} parent=11 // pred_fallthru
        _
      // Predicated region
      $region29: #{_forward_impl.2} parent=11 // pred_check
        %p265 = pneg %p186
      $region30: #{_forward_impl.2} parent=11 // pred_check_branch
        %267 = sbr.rel (%p265) target = $region32
      $region31: #{_forward_impl.2} parent=11 // pred_region
        _
      $region32: #{_forward_impl.2} parent=11 // pred_fallthru
        _
    $region12: #{_forward_impl.2} parent=5 // pred_fallthru
      _
    %p268 = scmp.lt.s32.totalorder %s15, 2
    // Predicated region
    $region33: #{_forward_impl.2} parent=5 // pred_check
      %p269 = pneg %p268
    $region34: #{_forward_impl.2} parent=5 // pred_check_branch
      %271 = sbr.rel (%p269) target = $region36
    $region35: #{_forward_impl.2} parent=5 // pred_region
      // Predicated region
      $region37: #{_forward_impl.2} parent=35 // pred_check
        %p272 = pneg %p49
      $region38: #{_forward_impl.2} parent=35 // pred_check_branch
        %274 = sbr.rel (%p272) target = $region40
      $region39: #{_forward_impl.2} parent=35 // pred_region
        %s275 = smul.u32 2, %s23
        %p276 = scmp.lt.s32.totalorder %s22, 1
        %s277 = scalar_select %p276, %s22, 1
        %p278 = scmp.lt.s32.totalorder %s275, 1
        %s279 = scalar_select %p278, %s275, 1
        %s280 = smul.addr %s277, 2
        %s281 = sadd.s32 %s279, %s280
        %s282 = smul.addr %s281, 8
        %s283 = scalar_lea.vmem %s0, %s282
        %s284 = smul.u32 2, %s23
      $region40: #{_forward_impl.2} parent=35 // pred_fallthru
        _
      // Predicated region
      $region41: #{_forward_impl.2} parent=35 // pred_check
        %p285 = pneg %p75
      $region42: #{_forward_impl.2} parent=35 // pred_check_branch
        %287 = sbr.rel (%p285) target = $region44
      $region43: #{_forward_impl.2} parent=35 // pred_region
        %p288 = scmp.lt.s32.totalorder %s22, 1
        %s289 = scalar_select %p288, %s22, 1
        %s290 = smul.addr %s289, 2
        %s291 = smul.addr %s290, 8
        %s292 = scalar_lea.vmem %s1, %s291
      $region44: #{_forward_impl.2} parent=35 // pred_fallthru
        _
    $region36: #{_forward_impl.2} parent=5 // pred_fallthru
      _
    %p293 = scmp.le.s32.totalorder 1, %s15
    %p294 = scmp.lt.s32.totalorder %s15, 3
    %p295 = pnand %p293, %p294
    %p296 = pneg %p295
    // Predicated region
    $region45: #{_forward_impl.2} parent=5 // pred_check
      _
    $region46: #{_forward_impl.2} parent=5 // pred_check_branch
      %298 = sbr.rel (%p295) target = $region48
    $region47: #{_forward_impl.2} parent=5 // pred_region
      %s299 = ssub.s32 %s15, 1
      %s300 = smul.u32 2, %s25
      %p301 = scmp.lt.s32.totalorder %s24, 1
      %s302 = scalar_select %p301, %s24, 1
      %p303 = scmp.lt.s32.totalorder %s300, 1
      %s304 = scalar_select %p303, %s300, 1
      %s305 = smul.addr %s302, 2
      %s306 = sadd.s32 %s304, %s305
      %s307 = smul.addr %s306, 8
      %s308 = scalar_lea.vmem %s0, %s307
      %p309 = pneg %p55
      %p310 = pneg %p52
      %p311 = scmp.lt.s32.totalorder %s24, 1
      %s312 = scalar_select %p311, %s24, 1
      %s313 = smul.addr %s312, 2
      %s314 = smul.addr %s313, 8
      %s315 = scalar_lea.vmem %s1, %s314
      %p316 = pneg %p81
      %p317 = pneg %p78
      %p318 = pneg %p102
      %p319 = pneg %p99
      %p320 = pneg %p123
      %p321 = pneg %p120
      %p322 = pneg %p144
      %p323 = pneg %p141
      %p324 = pneg %p165
      %p325 = pneg %p162
      %p326 = pneg %p186
      %p327 = pneg %p183
      %p328 = pneg %p212
      %p329 = pneg %p209
      %p330 = scmp.lt.s32.totalorder %s24, 1
      %s331 = scalar_select %p330, %s24, 1
      %s332 = smul.addr %s331, 4
      %s333 = scalar_lea.vmem %s7, %s332
      %p334 = pneg %p238
      %p335 = pneg %p235
      %p336 = scmp.lt.s32.totalorder %s24, 1
      %s337 = scalar_select %p336, %s24, 1
      %s338 = smul.addr %s337, 2
      %s339 = smul.addr %s338, 8
      %s340 = scalar_lea.vmem %s8, %s339
      %s341 = smul.u32 2, %s25
      %p342 = scmp.lt.s32.totalorder %s24, 1
      %s343 = scalar_select %p342, %s24, 1
      %p344 = scmp.lt.s32.totalorder %s341, 1
      %s345 = scalar_select %p344, %s341, 1
      %s346 = smul.addr %s343, 2
      %s347 = sadd.s32 %s345, %s346
      %s348 = smul.addr %s347, 8
      %s349 = scalar_lea.vmem %s0, %s348
      %s350 = smul.u32 2, %s25
      %p351 = scmp.lt.s32.totalorder %s24, 1
      %s352 = scalar_select %p351, %s24, 1
      %s353 = smul.addr %s352, 2
      %s354 = smul.addr %s353, 8
      %s355 = scalar_lea.vmem %s1, %s354
      %p356 = scmp.lt.s32.totalorder %s24, 1
      %s357 = scalar_select %p356, %s24, 1
      %s358 = smul.addr %s357, 4
      %s359 = scalar_lea.vmem %s7, %s358
      %p360 = scmp.lt.s32.totalorder %s24, 1
      %s361 = scalar_select %p360, %s24, 1
      %s362 = smul.addr %s361, 2
      %s363 = smul.addr %s362, 8
      %s364 = scalar_lea.vmem %s8, %s363
      %p365 = scmp.eq.s32.totalorder %s25, 0
      // Predicated region
      $region49: #{_forward_impl.2} parent=47 // pred_check
        %p366 = pneg %p365
      $region50: #{_forward_impl.2} parent=47 // pred_check_branch
        %368 = sbr.rel (%p366) target = $region52
      $region51: #{_forward_impl.2} parent=47 // pred_region
        %vm369 = vcmask 7168
        %370 = vst.msk [vmem:[#allocation2] sm:$0xff] %vm369, 0.0
      $region52: #{_forward_impl.2} parent=47 // pred_fallthru
        _
      %v371 = vld [vmem:[%s349] sm:$0xff]
      %v372 = vld [vmem:[%s349 + $0x8] sm:$0xff]
      %v373 = vld [vmem:[#allocation2] sm:$0xff]
      %374 = vmatprep.subr.mxu0 0.0
      %375 = vmatpush1.msra.mxu0 1.0
      %376 = vmatprep.subr.mxu0 0.0
      %377 = vmatpush1.msra.mxu0 1.0
      %378 = vmatprep.subr.mxu0 0.0
      %379 = vmatpush1.msra.mxu0 1.0
      %380 = vmatprep.subr.mxu0 0.0
      %381 = vmatpush1.msra.mxu0 1.0
      %382 = vmatprep.subr.mxu0 0.0
      %383 = vmatpush1.msra.mxu0 1.0
      %384 = vmatprep.subr.mxu0 0.0
      %385 = vmatpush1.msra.mxu0 1.0
      %386 = vmatprep.subr.mxu0 0.0
      %387 = vmatpush1.msra.mxu0 1.0
      %388 = vmatprep.subr.mxu0 0.0
      %389 = vmatpush1.msra.mxu0 1.0
      %390 = vmatprep.subr.mxu0 0.0
      %391 = vmatpush1.msra.mxu0 1.0
      %392 = vmatprep.subr.mxu0 0.0
      %393 = vmatpush1.msra.mxu0 1.0
      %394 = vmatprep.subr.mxu0 0.0
      %395 = vmatpush1.msra.mxu0 1.0
      %396 = vmatprep.subr.mxu0 0.0
      %397 = vmatpush1.msra.mxu0 1.0
      %398 = vmatprep.subr.mxu0 0.0
      %399 = vmatpush1.msra.mxu0 1.0
      %400 = vmatprep.subr.mxu0 0.0
      %401 = vmatpush1.msra.mxu0 1.0
      %402 = vmatprep.subr.mxu0 0.0
      %403 = vmatpush1.msra.mxu0 1.0
      %404 = vmatprep.subr.mxu0 0.0
      %405 = vmatpush1.msra.mxu0 1.0
      %406 = vmatprep.subr.mxu0 0.0
      %407 = vmatpush2.msra.mxu0 1.0
      %408 = vmatprep.subr.mxu0 0.0
      %409 = vmatpush2.msra.mxu0 1.0
      %410 = vmatprep.subr.mxu0 0.0
      %411 = vmatpush2.msra.mxu0 1.0
      %412 = vmatprep.subr.mxu0 0.0
      %413 = vmatpush2.msra.mxu0 1.0
      %414 = vmatprep.subr.mxu0 0.0
      %415 = vmatpush2.msra.mxu0 1.0
      %416 = vmatprep.subr.mxu0 0.0
      %417 = vmatpush2.msra.mxu0 1.0
      %418 = vmatprep.subr.mxu0 0.0
      %419 = vmatpush2.msra.mxu0 1.0
      %420 = vmatprep.subr.mxu0 0.0
      %421 = vmatpush2.msra.mxu0 1.0
      %422 = vmatprep.subr.mxu0 0.0
      %423 = vmatpush2.msra.mxu0 1.0
      %424 = vmatprep.subr.mxu0 0.0
      %425 = vmatpush2.msra.mxu0 1.0
      %426 = vmatprep.subr.mxu0 0.0
      %427 = vmatpush2.msra.mxu0 1.0
      %428 = vmatprep.subr.mxu0 0.0
      %429 = vmatpush2.msra.mxu0 1.0
      %430 = vmatprep.subr.mxu0 0.0
      %431 = vmatpush2.msra.mxu0 1.0
      %432 = vmatprep.subr.mxu0 0.0
      %433 = vmatpush2.msra.mxu0 1.0
      %434 = vmatprep.subr.mxu0 0.0
      %435 = vmatpush2.msra.mxu0 1.0
      %436 = vmatprep.subr.mxu0 0.0
      %437 = vmatpush2.msra.mxu0 1.0
      %438 = vmatprep.mubr.f32.mxu0 %v372
      %439 = vmatmul.mubr.f32.gmra.mxu0 %v371
      %v440 = vpop.f32.mrf.mxu0
      %v441 = vadd.f32 0.0, %v440
      %v442 = vpop.f32.mrf.mxu0
      %443 = vdwg.mxu0
      %v444 = vadd.f32 %v373, %v441
      %vm445 = vcmask 7168
      %446 = vst.msk [vmem:[#allocation2] sm:$0xff] %vm445, %v444
      // Predicated region
      $region53: #{_forward_impl.2} parent=47 // pred_check
        %p447 = pneg %p365
      $region54: #{_forward_impl.2} parent=47 // pred_check_branch
        %449 = sbr.rel (%p447) target = $region56
      $region55: #{_forward_impl.2} parent=47 // pred_region
        %v450 = vld [vmem:[#allocation2] sm:$0xff]
        %v451 = vmul.f32 %v450, 0.00390625
        %v452 = vld [vmem:[%s2] sm:$0xff]
        %v453 = vld [vmem:[%s2 + $0x8] sm:$0xff]
        %v454 = vld [vmem:[%s3] sm:$0xff]
        %v455 = vld [vmem:[%s3 + $0x8] sm:$0xff]
        %v456 = vld [vmem:[%s355] sm:$0xff]
        %v457 = vld [vmem:[%s355 + $0x8] sm:$0xff]
        %vm458 = vcmask 130048
        %v460 = vsel %vm458, %v454, 0
        %v463 = vsel %vm458, %v455, 0
        %465 = vmatprep.subr.mxu0 0.0
        %466 = vmatpush1.msra.mxu0 0.0
        %467 = vmatprep.subr.mxu0 0.0
        %468 = vmatpush1.msra.mxu0 0.0
        %469 = vmatprep.subr.mxu0 0.0
        %470 = vmatpush1.msra.mxu0 0.0
        %471 = vmatprep.subr.mxu0 0.0
        %472 = vmatpush1.msra.mxu0 0.0
        %473 = vmatprep.subr.mxu0 0.0
        %474 = vmatpush1.msra.mxu0 0.0
        %475 = vmatprep.subr.mxu0 0.0
        %476 = vmatpush1.msra.mxu0 0.0
        %477 = vmatprep.subr.mxu0 0.0
        %478 = vmatpush1.msra.mxu0 0.0
        %479 = vmatprep.subr.mxu0 0.0
        %480 = vmatpush1.msra.mxu0 0.0
        %481 = vmatprep.subr.mxu0 0.0
        %482 = vmatpush1.msra.mxu0 0.0
        %483 = vmatprep.subr.mxu0 0.0
        %484 = vmatpush1.msra.mxu0 0.0
        %485 = vmatprep.subr.mxu0 0.0
        %486 = vmatpush1.msra.mxu0 0.0
        %487 = vmatprep.subr.mxu0 0.0
        %488 = vmatpush1.msra.mxu0 0.0
        %489 = vmatprep.subr.mxu0 0.0
        %490 = vmatpush1.msra.mxu0 0.0
        %491 = vmatprep.subr.mxu0 0.0
        %492 = vmatpush1.msra.mxu0 0.0
        %493 = vmatprep.subr.mxu0 0.0
        %494 = vmatpush1.msra.mxu0 %v457
        %495 = vmatprep.subr.mxu0 0.0
        %496 = vmatpush1.msra.mxu0 %v456
        %497 = vmatprep.subr.mxu0 0.0
        %498 = vmatpush2.msra.mxu0 0.0
        %499 = vmatprep.subr.mxu0 0.0
        %500 = vmatpush2.msra.mxu0 0.0
        %501 = vmatprep.subr.mxu0 0.0
        %502 = vmatpush2.msra.mxu0 0.0
        %503 = vmatprep.subr.mxu0 0.0
        %504 = vmatpush2.msra.mxu0 0.0
        %505 = vmatprep.subr.mxu0 0.0
        %506 = vmatpush2.msra.mxu0 0.0
        %507 = vmatprep.subr.mxu0 0.0
        %508 = vmatpush2.msra.mxu0 0.0
        %509 = vmatprep.subr.mxu0 0.0
        %510 = vmatpush2.msra.mxu0 0.0
        %511 = vmatprep.subr.mxu0 0.0
        %512 = vmatpush2.msra.mxu0 0.0
        %513 = vmatprep.subr.mxu0 0.0
        %514 = vmatpush2.msra.mxu0 0.0
        %515 = vmatprep.subr.mxu0 0.0
        %516 = vmatpush2.msra.mxu0 0.0
        %517 = vmatprep.subr.mxu0 0.0
        %518 = vmatpush2.msra.mxu0 0.0
        %519 = vmatprep.subr.mxu0 0.0
        %520 = vmatpush2.msra.mxu0 0.0
        %521 = vmatprep.subr.mxu0 0.0
        %522 = vmatpush2.msra.mxu0 0.0
        %523 = vmatprep.subr.mxu0 0.0
        %524 = vmatpush2.msra.mxu0 0.0
        %525 = vmatprep.subr.mxu0 0.0
        %526 = vmatpush2.msra.mxu0 0.0
        %527 = vmatprep.subr.mxu0 0.0
        %528 = vmatpush2.msra.mxu0 0.0
        %529 = vmatprep.mubr.f32.mxu0 0.0
        %530 = vmatmul.mubr.f32.gmra.mxu0 %v460
        %v531 = vpop.f32.mrf.mxu0
        %v532 = vadd.f32 0.0, %v531
        %v533 = vpop.f32.mrf.mxu0
        %534 = vmatprep.mubr.f32.mxu0 0.0
        %535 = vmatmul.mubr.f32.gmra.mxu0 %v463
        %v536 = vpop.f32.mrf.mxu0
        %v537 = vadd.f32 0.0, %v536
        %v538 = vpop.f32.mrf.mxu0
        %539 = vdwg.mxu0
        %vm540 = vcmask 64512
        %v542 = vsel %vm540, %v452, 0
        %v545 = vsel %vm540, %v453, 0
        %547 = vmatprep.subr.mxu0 0.0
        %548 = vmatpush1.msra.mxu0 0.0
        %549 = vmatprep.subr.mxu0 0.0
        %550 = vmatpush1.msra.mxu0 0.0
        %551 = vmatprep.subr.mxu0 0.0
        %552 = vmatpush1.msra.mxu0 0.0
        %553 = vmatprep.subr.mxu0 0.0
        %554 = vmatpush1.msra.mxu0 0.0
        %555 = vmatprep.subr.mxu0 0.0
        %556 = vmatpush1.msra.mxu0 0.0
        %557 = vmatprep.subr.mxu0 0.0
        %558 = vmatpush1.msra.mxu0 0.0
        %559 = vmatprep.subr.mxu0 0.0
        %560 = vmatpush1.msra.mxu0 0.0
        %561 = vmatprep.subr.mxu0 0.0
        %562 = vmatpush1.msra.mxu0 0.0
        %563 = vmatprep.subr.mxu0 0.0
        %564 = vmatpush1.msra.mxu0 0.0
        %565 = vmatprep.subr.mxu0 0.0
        %566 = vmatpush1.msra.mxu0 0.0
        %567 = vmatprep.subr.mxu0 0.0
        %568 = vmatpush1.msra.mxu0 0.0
        %569 = vmatprep.subr.mxu0 0.0
        %570 = vmatpush1.msra.mxu0 0.0
        %571 = vmatprep.subr.mxu0 0.0
        %572 = vmatpush1.msra.mxu0 0.0
        %573 = vmatprep.subr.mxu0 0.0
        %574 = vmatpush1.msra.mxu0 0.0
        %575 = vmatprep.subr.mxu0 0.0
        %576 = vmatpush1.msra.mxu0 0.0
        %577 = vmatprep.subr.mxu0 0.0
        %578 = vmatpush1.msra.mxu0 %v451
        %579 = vmatprep.subr.mxu0 0.0
        %580 = vmatpush2.msra.mxu0 0.0
        %581 = vmatprep.subr.mxu0 0.0
        %582 = vmatpush2.msra.mxu0 0.0
        %583 = vmatprep.subr.mxu0 0.0
        %584 = vmatpush2.msra.mxu0 0.0
        %585 = vmatprep.subr.mxu0 0.0
        %586 = vmatpush2.msra.mxu0 0.0
        %587 = vmatprep.subr.mxu0 0.0
        %588 = vmatpush2.msra.mxu0 0.0
        %589 = vmatprep.subr.mxu0 0.0
        %590 = vmatpush2.msra.mxu0 0.0
        %591 = vmatprep.subr.mxu0 0.0
        %592 = vmatpush2.msra.mxu0 0.0
        %593 = vmatprep.subr.mxu0 0.0
        %594 = vmatpush2.msra.mxu0 0.0
        %595 = vmatprep.subr.mxu0 0.0
        %596 = vmatpush2.msra.mxu0 0.0
        %597 = vmatprep.subr.mxu0 0.0
        %598 = vmatpush2.msra.mxu0 0.0
        %599 = vmatprep.subr.mxu0 0.0
        %600 = vmatpush2.msra.mxu0 0.0
        %601 = vmatprep.subr.mxu0 0.0
        %602 = vmatpush2.msra.mxu0 0.0
        %603 = vmatprep.subr.mxu0 0.0
        %604 = vmatpush2.msra.mxu0 0.0
        %605 = vmatprep.subr.mxu0 0.0
        %606 = vmatpush2.msra.mxu0 0.0
        %607 = vmatprep.subr.mxu0 0.0
        %608 = vmatpush2.msra.mxu0 0.0
        %609 = vmatprep.subr.mxu0 0.0
        %610 = vmatpush2.msra.mxu0 0.0
        %611 = vmatprep.mubr.f32.mxu0 0.0
        %612 = vmatmul.mubr.f32.gmra.mxu0 %v542
        %v613 = vpop.f32.mrf.mxu0
        %v614 = vadd.f32 %v532, %v613
        %v615 = vpop.f32.mrf.mxu0
        %616 = vmatprep.mubr.f32.mxu0 0.0
        %617 = vmatmul.mubr.f32.gmra.mxu0 %v545
        %v618 = vpop.f32.mrf.mxu0
        %v619 = vadd.f32 %v537, %v618
        %v620 = vpop.f32.mrf.mxu0
        %621 = vdwg.mxu0
        %v622 = vld [vmem:[%s4] sm:$0xff]
        %v623 = vld [vmem:[%s4 + $0x8] sm:$0xff]
        %v624 = vadd.f32 %v614, %v622
        %v625 = vadd.f32 %v619, %v623
        %v626 = vmul.f32 %v624, 0.5
        %v627 = vmul.f32 %v625, 0.5
        %v628 = vmul.f32 %v624, 0.044715
        %v629 = vmul.f32 %v625, 0.044715
        %v630 = vmul.f32 %v628, %v624
        %v631 = vmul.f32 %v629, %v625
        %v632 = vmul.f32 %v630, %v624
        %v633 = vmul.f32 %v631, %v625
        %v634 = vadd.f32 %v624, %v632
        %v635 = vadd.f32 %v625, %v633
        %v636 = vmul.f32 %v634, 0.7978846
        %v637 = vmul.f32 %v635, 0.7978846
        %v638 = vtanh.pop %v636
        %v639 = vtanh.pop %v637
        %v640 = vadd.f32 %v638, 1.0
        %v641 = vadd.f32 %v639, 1.0
        %v642 = vmul.f32 %v626, %v640
        %v643 = vmul.f32 %v627, %v641
        %v644 = vld [vmem:[%s5] sm:$0x7]
        %v645 = vld [vmem:[%s6] sm:$0x7]
        %v647 = vsel %vm458, %v644, 0
        %649 = vmatprep.subr.mxu0 0.0
        %650 = vmatpush1.msra.mxu0 0.0
        %651 = vmatprep.subr.mxu0 0.0
        %652 = vmatpush1.msra.mxu0 0.0
        %653 = vmatprep.subr.mxu0 0.0
        %654 = vmatpush1.msra.mxu0 0.0
        %655 = vmatprep.subr.mxu0 0.0
        %656 = vmatpush1.msra.mxu0 0.0
        %657 = vmatprep.subr.mxu0 0.0
        %658 = vmatpush1.msra.mxu0 0.0
        %659 = vmatprep.subr.mxu0 0.0
        %660 = vmatpush1.msra.mxu0 0.0
        %661 = vmatprep.subr.mxu0 0.0
        %662 = vmatpush1.msra.mxu0 0.0
        %663 = vmatprep.subr.mxu0 0.0
        %664 = vmatpush1.msra.mxu0 0.0
        %665 = vmatprep.subr.mxu0 0.0
        %666 = vmatpush1.msra.mxu0 0.0
        %667 = vmatprep.subr.mxu0 0.0
        %668 = vmatpush1.msra.mxu0 0.0
        %669 = vmatprep.subr.mxu0 0.0
        %670 = vmatpush1.msra.mxu0 0.0
        %671 = vmatprep.subr.mxu0 0.0
        %672 = vmatpush1.msra.mxu0 0.0
        %673 = vmatprep.subr.mxu0 0.0
        %674 = vmatpush1.msra.mxu0 0.0
        %675 = vmatprep.subr.mxu0 0.0
        %676 = vmatpush1.msra.mxu0 0.0
        %677 = vmatprep.subr.mxu0 0.0
        %678 = vmatpush1.msra.mxu0 %v643
        %679 = vmatprep.subr.mxu0 0.0
        %680 = vmatpush1.msra.mxu0 %v642
        %681 = vmatprep.subr.mxu0 0.0
        %682 = vmatpush2.msra.mxu0 0.0
        %683 = vmatprep.subr.mxu0 0.0
        %684 = vmatpush2.msra.mxu0 0.0
        %685 = vmatprep.subr.mxu0 0.0
        %686 = vmatpush2.msra.mxu0 0.0
        %687 = vmatprep.subr.mxu0 0.0
        %688 = vmatpush2.msra.mxu0 0.0
        %689 = vmatprep.subr.mxu0 0.0
        %690 = vmatpush2.msra.mxu0 0.0
        %691 = vmatprep.subr.mxu0 0.0
        %692 = vmatpush2.msra.mxu0 0.0
        %693 = vmatprep.subr.mxu0 0.0
        %694 = vmatpush2.msra.mxu0 0.0
        %695 = vmatprep.subr.mxu0 0.0
        %696 = vmatpush2.msra.mxu0 0.0
        %697 = vmatprep.subr.mxu0 0.0
        %698 = vmatpush2.msra.mxu0 0.0
        %699 = vmatprep.subr.mxu0 0.0
        %700 = vmatpush2.msra.mxu0 0.0
        %701 = vmatprep.subr.mxu0 0.0
        %702 = vmatpush2.msra.mxu0 0.0
        %703 = vmatprep.subr.mxu0 0.0
        %704 = vmatpush2.msra.mxu0 0.0
        %705 = vmatprep.subr.mxu0 0.0
        %706 = vmatpush2.msra.mxu0 0.0
        %707 = vmatprep.subr.mxu0 0.0
        %708 = vmatpush2.msra.mxu0 0.0
        %709 = vmatprep.subr.mxu0 0.0
        %710 = vmatpush2.msra.mxu0 0.0
        %711 = vmatprep.subr.mxu0 0.0
        %712 = vmatpush2.msra.mxu0 0.0
        %713 = vmatprep.mubr.f32.mxu0 0.0
        %714 = vmatmul.mubr.f32.gmra.mxu0 %v647
        %v715 = vpop.f32.mrf.mxu0
        %v716 = vadd.f32 %v645, %v715
        %v717 = vpop.f32.mrf.mxu0
        %718 = vdwg.mxu0
        %v719 = vmax.f32 %v716, 0.0
        %vm720 = vcmask 2048
        %721 = vst.msk [vmem:[%s359] sm:$0x7] %vm720, %v719
        %722 = vst.msk [vmem:[%s364] sm:$0xff] %vm445, %v642
        %723 = vst.msk [vmem:[%s364 + $0x8] sm:$0xff] %vm445, %v643
      $region56: #{_forward_impl.2} parent=47 // pred_fallthru
        _
      %p724 = scmp.lt.s32.totalorder %s24, 1
      %s725 = scalar_select %p724, %s24, 1
      %s726 = smul.addr %s725, 4
      %s727 = scalar_lea.vmem %s7, %s726
      %p728 = scmp.lt.s32.totalorder %s24, 1
      %s729 = scalar_select %p728, %s24, 1
      %s730 = smul.addr %s729, 2
      %s731 = smul.addr %s730, 8
      %s732 = scalar_lea.vmem %s8, %s731
      // Predicated region
      $region57: #{_forward_impl.2} parent=47 // pred_check
        %p733 = pneg %p209
      $region58: #{_forward_impl.2} parent=47 // pred_check_branch
        %735 = sbr.rel (%p733) target = $region60
      $region59: #{_forward_impl.2} parent=47 // pred_region
        _
      $region60: #{_forward_impl.2} parent=47 // pred_fallthru
        _
      // Predicated region
      $region61: #{_forward_impl.2} parent=47 // pred_check
        %p736 = pneg %p235
      $region62: #{_forward_impl.2} parent=47 // pred_check_branch
        %738 = sbr.rel (%p736) target = $region64
      $region63: #{_forward_impl.2} parent=47 // pred_region
        _
      $region64: #{_forward_impl.2} parent=47 // pred_fallthru
        _
    $region48: #{_forward_impl.2} parent=5 // pred_fallthru
      _
    %p739 = scmp.le.s32.totalorder 2, %s15
    // Predicated region
    $region65: #{_forward_impl.2} parent=5 // pred_check
      %p740 = pneg %p739
    $region66: #{_forward_impl.2} parent=5 // pred_check_branch
      %742 = sbr.rel (%p740) target = $region68
    $region67: #{_forward_impl.2} parent=5 // pred_region
      %s743 = ssub.s32 %s15, 2
      // Predicated region
      $region69: #{_forward_impl.2} parent=67 // pred_check
        %p744 = pneg %p215
      $region70: #{_forward_impl.2} parent=67 // pred_check_branch
        %746 = sbr.rel (%p744) target = $region72
      $region71: #{_forward_impl.2} parent=67 // pred_region
        %p747 = scmp.lt.s32.totalorder %s26, 1
        %s748 = scalar_select %p747, %s26, 1
        %s749 = smul.addr %s748, 4
        %s750 = scalar_lea.vmem %s7, %s749
      $region72: #{_forward_impl.2} parent=67 // pred_fallthru
        _
      // Predicated region
      $region73: #{_forward_impl.2} parent=67 // pred_check
        %p751 = pneg %p241
      $region74: #{_forward_impl.2} parent=67 // pred_check_branch
        %753 = sbr.rel (%p751) target = $region76
      $region75: #{_forward_impl.2} parent=67 // pred_region
        %p754 = scmp.lt.s32.totalorder %s26, 1
        %s755 = scalar_select %p754, %s26, 1
        %s756 = smul.addr %s755, 2
        %s757 = smul.addr %s756, 8
        %s758 = scalar_lea.vmem %s8, %s757
      $region76: #{_forward_impl.2} parent=67 // pred_fallthru
        _
    $region68: #{_forward_impl.2} parent=5 // pred_fallthru
      _
  $region6: #{_forward_impl.2} parent=0 // loop_footer
    %s19 = sadd.s32 1, %s15
  $region7: #{_forward_impl.2} parent=0 // loop_footer_branch
    %14 = sbr.rel target = $region3
  $region8: #{_forward_impl.2} parent=0 // loop_exit
    _

// kernel: _forward_impl.3
$region0: #{_forward_impl.3}
  #allocation0 [shape = 'u32[]', space=smem, size = 0x4, offset = 0x4, fixed_abs, tag = 'smem constant byte address 0x4 - core index']
  #allocation1 [shape = 'u32[144,128]{1,0:T(1,128)}', space=vmem, size = 0x12000, scoped, tag = 'internal scratch']
  %s0 = inlined_call_operand.vmem [shape: f32[2,8,256], index: 0, kind: input, shape index: {}]
  %s1 = inlined_call_operand.vmem [shape: f32[56,8], index: 1, kind: input, shape index: {}]
  %s2 = inlined_call_operand.vmem [shape: f32[56,1], index: 2, kind: input, shape index: {}]
  %s3 = inlined_call_operand.vmem [shape: f32[8,56], index: 3, kind: input, shape index: {}]
  %s4 = inlined_call_operand.vmem [shape: f32[2,56,1], index: 4, kind: input, shape index: {}]
  %s5 = inlined_call_operand.vmem [shape: f32[2,8,1], index: 5, kind: input, shape index: {}]
  %s6 = inlined_call_operand.vmem [shape: f32[2,8,256], index: 6, kind: output, shape index: {}]
  %s7 = sld [smem:[#allocation0]]
  $region57: #{_forward_impl.3} parent=0
    _
  %s9 = ssub.s32 1, %s7
  %s10 = scalar_select 0, %s9, %s7
  loop: start=0, step=1, limit=4
  $region2: #{_forward_impl.3} parent=0 // loop_pre_header
    _
  $region3: #{_forward_impl.3} parent=0 // loop_header
    %s12 = sphi 0, %s16
    %p13 = scmp.ge.s32.totalorder %s12, 4
    %s19 = sphi 0, %s31
    %s20 = sphi 0, %s27
    %s21 = sphi 0, %s19
    %s22 = sphi 0, %s20
    %s23 = sphi 0, %s21
    %s24 = sphi 0, %s22
    %s36 = sphi 0, %s38
    %s39 = sphi 0, %s36
    %s40 = sphi 0, %s39
    %s56 = sphi 0, %s40
    %s60 = sphi 0, %s60
    %s62 = sphi 0, %s60
    %s63 = sphi 0, %s62
    %s77 = sphi 0, %s63
    %s81 = sphi 0, %s81
    %s83 = sphi 0, %s81
    %s84 = sphi 0, %s83
    %s98 = sphi 0, %s84
    %s102 = sphi 0, %s102
    %s104 = sphi 0, %s102
    %s105 = sphi 0, %s104
    %s119 = sphi 0, %s105
    %s125 = sphi 0, %s127
    %s128 = sphi 0, %s125
    %s129 = sphi 0, %s128
    %s145 = sphi 0, %s129
    %s151 = sphi 0, %s153
    %s154 = sphi 0, %s151
    %s155 = sphi 0, %s154
    %s171 = sphi 0, %s155
    %s179 = sphi 0, %s181
    %s182 = sphi 0, %s179
    %s183 = sphi 0, %s182
    %s199 = sphi 0, %s183
  $region4: #{_forward_impl.3} parent=0 // loop_header_branch
    %15 = sbr.rel (%p13) target = $region8
  $region5: #{_forward_impl.3} parent=0 // loop_body
    %s17 = ssub.s32 %s12, 1
    %s18 = ssub.s32 %s12, 2
    %s25 = sadd.s32 1, %s20
    %p26 = scmp.ge.s32.totalorder %s25, 1
    %s27 = scalar_select %p26, 0, %s25
    %s28 = sadd.s32 1, %s19
    %s29 = scalar_select %p26, %s28, %s19
    %p30 = scmp.ge.s32.totalorder %s29, 2
    %s31 = scalar_select %p30, 0, %s29
    %s32 = ssub.s32 %s19, %s31
    %s33 = ssub.s32 %s20, %s27
    %s34 = sor.u32 %s32, %s33
    %p35 = scmp.eq.s32.totalorder %s34, 0
    %s37 = sadd.s32 %s36, 1
    %s38 = scalar_select %p35, %s36, %s37
    %p41 = pneg %p35
    %p42 = scmp.eq.s32.totalorder %s12, 1
    %p43 = por %p41, %p42
    %p44 = scmp.ne.s32.totalorder %s36, %s39
    %p45 = scmp.eq.s32.totalorder %s12, 0
    %p46 = por %p44, %p45
    %p47 = scmp.ne.s32.totalorder %s36, %s39
    %p48 = scmp.eq.s32.totalorder %s17, 1
    %p49 = por %p47, %p48
    %p50 = scmp.ne.s32.totalorder %s39, %s40
    %p51 = scmp.eq.s32.totalorder %s17, 0
    %p52 = por %p50, %p51
    %p53 = scmp.ne.s32.totalorder %s39, %s40
    %p54 = scmp.eq.s32.totalorder %s18, 1
    %p55 = por %p53, %p54
    %p57 = scmp.ne.s32.totalorder %s40, %s56
    %p58 = scmp.eq.s32.totalorder %s18, 0
    %p59 = por %p57, %p58
    %s61 = sadd.s32 %s60, 1
    %p64 = scmp.eq.s32.totalorder %s12, 1
    %p65 = scmp.ne.s32.totalorder %s60, %s62
    %p66 = scmp.eq.s32.totalorder %s12, 0
    %p67 = por %p65, %p66
    %p68 = scmp.ne.s32.totalorder %s60, %s62
    %p69 = scmp.eq.s32.totalorder %s17, 1
    %p70 = por %p68, %p69
    %p71 = scmp.ne.s32.totalorder %s62, %s63
    %p72 = scmp.eq.s32.totalorder %s17, 0
    %p73 = por %p71, %p72
    %p74 = scmp.ne.s32.totalorder %s62, %s63
    %p75 = scmp.eq.s32.totalorder %s18, 1
    %p76 = por %p74, %p75
    %p78 = scmp.ne.s32.totalorder %s63, %s77
    %p79 = scmp.eq.s32.totalorder %s18, 0
    %p80 = por %p78, %p79
    %s82 = sadd.s32 %s81, 1
    %p85 = scmp.eq.s32.totalorder %s12, 1
    %p86 = scmp.ne.s32.totalorder %s81, %s83
    %p87 = scmp.eq.s32.totalorder %s12, 0
    %p88 = por %p86, %p87
    %p89 = scmp.ne.s32.totalorder %s81, %s83
    %p90 = scmp.eq.s32.totalorder %s17, 1
    %p91 = por %p89, %p90
    %p92 = scmp.ne.s32.totalorder %s83, %s84
    %p93 = scmp.eq.s32.totalorder %s17, 0
    %p94 = por %p92, %p93
    %p95 = scmp.ne.s32.totalorder %s83, %s84
    %p96 = scmp.eq.s32.totalorder %s18, 1
    %p97 = por %p95, %p96
    %p99 = scmp.ne.s32.totalorder %s84, %s98
    %p100 = scmp.eq.s32.totalorder %s18, 0
    %p101 = por %p99, %p100
    %s103 = sadd.s32 %s102, 1
    %p106 = scmp.eq.s32.totalorder %s12, 1
    %p107 = scmp.ne.s32.totalorder %s102, %s104
    %p108 = scmp.eq.s32.totalorder %s12, 0
    %p109 = por %p107, %p108
    %p110 = scmp.ne.s32.totalorder %s102, %s104
    %p111 = scmp.eq.s32.totalorder %s17, 1
    %p112 = por %p110, %p111
    %p113 = scmp.ne.s32.totalorder %s104, %s105
    %p114 = scmp.eq.s32.totalorder %s17, 0
    %p115 = por %p113, %p114
    %p116 = scmp.ne.s32.totalorder %s104, %s105
    %p117 = scmp.eq.s32.totalorder %s18, 1
    %p118 = por %p116, %p117
    %p120 = scmp.ne.s32.totalorder %s105, %s119
    %p121 = scmp.eq.s32.totalorder %s18, 0
    %p122 = por %p120, %p121
    %s123 = ssub.s32 %s19, %s31
    %p124 = scmp.eq.s32.totalorder %s123, 0
    %s126 = sadd.s32 %s125, 1
    %s127 = scalar_select %p124, %s125, %s126
    %p130 = pneg %p124
    %p131 = scmp.eq.s32.totalorder %s12, 1
    %p132 = por %p130, %p131
    %p133 = scmp.ne.s32.totalorder %s125, %s128
    %p134 = scmp.eq.s32.totalorder %s12, 0
    %p135 = por %p133, %p134
    %p136 = scmp.ne.s32.totalorder %s125, %s128
    %p137 = scmp.eq.s32.totalorder %s17, 1
    %p138 = por %p136, %p137
    %p139 = scmp.ne.s32.totalorder %s128, %s129
    %p140 = scmp.eq.s32.totalorder %s17, 0
    %p141 = por %p139, %p140
    %p142 = scmp.ne.s32.totalorder %s128, %s129
    %p143 = scmp.eq.s32.totalorder %s18, 1
    %p144 = por %p142, %p143
    %p146 = scmp.ne.s32.totalorder %s129, %s145
    %p147 = scmp.eq.s32.totalorder %s18, 0
    %p148 = por %p146, %p147
    %s149 = ssub.s32 %s19, %s31
    %p150 = scmp.eq.s32.totalorder %s149, 0
    %s152 = sadd.s32 %s151, 1
    %s153 = scalar_select %p150, %s151, %s152
    %p156 = pneg %p150
    %p157 = scmp.eq.s32.totalorder %s12, 1
    %p158 = por %p156, %p157
    %p159 = scmp.ne.s32.totalorder %s151, %s154
    %p160 = scmp.eq.s32.totalorder %s12, 0
    %p161 = por %p159, %p160
    %p162 = scmp.ne.s32.totalorder %s151, %s154
    %p163 = scmp.eq.s32.totalorder %s17, 1
    %p164 = por %p162, %p163
    %p165 = scmp.ne.s32.totalorder %s154, %s155
    %p166 = scmp.eq.s32.totalorder %s17, 0
    %p167 = por %p165, %p166
    %p168 = scmp.ne.s32.totalorder %s154, %s155
    %p169 = scmp.eq.s32.totalorder %s18, 1
    %p170 = por %p168, %p169
    %p172 = scmp.ne.s32.totalorder %s155, %s171
    %p173 = scmp.eq.s32.totalorder %s18, 0
    %p174 = por %p172, %p173
    %s175 = ssub.s32 %s19, %s31
    %s176 = ssub.s32 %s20, %s27
    %s177 = sor.u32 %s175, %s176
    %p178 = scmp.eq.s32.totalorder %s177, 0
    %s180 = sadd.s32 %s179, 1
    %s181 = scalar_select %p178, %s179, %s180
    %p184 = pneg %p178
    %p185 = scmp.eq.s32.totalorder %s12, 1
    %p186 = por %p184, %p185
    %p187 = scmp.ne.s32.totalorder %s179, %s182
    %p188 = scmp.eq.s32.totalorder %s12, 0
    %p189 = por %p187, %p188
    %p190 = scmp.ne.s32.totalorder %s179, %s182
    %p191 = scmp.eq.s32.totalorder %s17, 1
    %p192 = por %p190, %p191
    %p193 = scmp.ne.s32.totalorder %s182, %s183
    %p194 = scmp.eq.s32.totalorder %s17, 0
    %p195 = por %p193, %p194
    %p196 = scmp.ne.s32.totalorder %s182, %s183
    %p197 = scmp.eq.s32.totalorder %s18, 1
    %p198 = por %p196, %p197
    %p200 = scmp.ne.s32.totalorder %s183, %s199
    %p201 = scmp.eq.s32.totalorder %s18, 0
    %p202 = por %p200, %p201
    %p203 = scmp.le.s32.totalorder 1, %s12
    %p204 = scmp.lt.s32.totalorder %s12, 3
    %p205 = pnand %p203, %p204
    %p206 = pneg %p205
    // Predicated region
    $region9: #{_forward_impl.3} parent=5 // pred_check
      _
    $region10: #{_forward_impl.3} parent=5 // pred_check_branch
      %208 = sbr.rel (%p205) target = $region12
    $region11: #{_forward_impl.3} parent=5 // pred_region
      %s209 = ssub.s32 %s12, 1
      // Predicated region
      $region13: #{_forward_impl.3} parent=11 // pred_check
        %p210 = pneg %p73
      $region14: #{_forward_impl.3} parent=11 // pred_check_branch
        %212 = sbr.rel (%p210) target = $region16
      $region15: #{_forward_impl.3} parent=11 // pred_region
        _
      $region16: #{_forward_impl.3} parent=11 // pred_fallthru
        _
      // Predicated region
      $region17: #{_forward_impl.3} parent=11 // pred_check
        %p213 = pneg %p94
      $region18: #{_forward_impl.3} parent=11 // pred_check_branch
        %215 = sbr.rel (%p213) target = $region20
      $region19: #{_forward_impl.3} parent=11 // pred_region
        _
      $region20: #{_forward_impl.3} parent=11 // pred_fallthru
        _
      // Predicated region
      $region21: #{_forward_impl.3} parent=11 // pred_check
        %p216 = pneg %p115
      $region22: #{_forward_impl.3} parent=11 // pred_check_branch
        %218 = sbr.rel (%p216) target = $region24
      $region23: #{_forward_impl.3} parent=11 // pred_region
        _
      $region24: #{_forward_impl.3} parent=11 // pred_fallthru
        _
    $region12: #{_forward_impl.3} parent=5 // pred_fallthru
      _
    %p219 = scmp.lt.s32.totalorder %s12, 2
    // Predicated region
    $region25: #{_forward_impl.3} parent=5 // pred_check
      %p220 = pneg %p219
    $region26: #{_forward_impl.3} parent=5 // pred_check_branch
      %222 = sbr.rel (%p220) target = $region28
    $region27: #{_forward_impl.3} parent=5 // pred_region
      // Predicated region
      $region29: #{_forward_impl.3} parent=27 // pred_check
        %p223 = pneg %p46
      $region30: #{_forward_impl.3} parent=27 // pred_check_branch
        %225 = sbr.rel (%p223) target = $region32
      $region31: #{_forward_impl.3} parent=27 // pred_region
        %s226 = smul.u32 2, %s20
        %p227 = scmp.lt.s32.totalorder %s19, 1
        %s228 = scalar_select %p227, %s19, 1
        %p229 = scmp.lt.s32.totalorder %s226, 1
        %s230 = scalar_select %p229, %s226, 1
        %s231 = smul.addr %s228, 2
        %s232 = sadd.s32 %s230, %s231
        %s233 = smul.addr %s232, 8
        %s234 = scalar_lea.vmem %s0, %s233
        %s235 = smul.u32 2, %s20
      $region32: #{_forward_impl.3} parent=27 // pred_fallthru
        _
      // Predicated region
      $region33: #{_forward_impl.3} parent=27 // pred_check
        %p236 = pneg %p135
      $region34: #{_forward_impl.3} parent=27 // pred_check_branch
        %238 = sbr.rel (%p236) target = $region36
      $region35: #{_forward_impl.3} parent=27 // pred_region
        %p239 = scmp.lt.s32.totalorder %s19, 1
        %s240 = scalar_select %p239, %s19, 1
        %s241 = smul.addr %s240, 7
        %s242 = smul.addr %s241, 8
        %s243 = scalar_lea.vmem %s4, %s242
      $region36: #{_forward_impl.3} parent=27 // pred_fallthru
        _
      // Predicated region
      $region37: #{_forward_impl.3} parent=27 // pred_check
        %p244 = pneg %p161
      $region38: #{_forward_impl.3} parent=27 // pred_check_branch
        %246 = sbr.rel (%p244) target = $region40
      $region39: #{_forward_impl.3} parent=27 // pred_region
        %p247 = scmp.lt.s32.totalorder %s19, 1
        %s248 = scalar_select %p247, %s19, 1
        %s249 = smul.addr %s248, 8
        %s250 = scalar_lea.vmem %s5, %s249
      $region40: #{_forward_impl.3} parent=27 // pred_fallthru
        _
    $region28: #{_forward_impl.3} parent=5 // pred_fallthru
      _
    %p251 = scmp.le.s32.totalorder 1, %s12
    %p252 = scmp.lt.s32.totalorder %s12, 3
    %p253 = pnand %p251, %p252
    %p254 = pneg %p253
    // Predicated region
    $region41: #{_forward_impl.3} parent=5 // pred_check
      _
    $region42: #{_forward_impl.3} parent=5 // pred_check_branch
      %256 = sbr.rel (%p253) target = $region44
    $region43: #{_forward_impl.3} parent=5 // pred_region
      %s257 = ssub.s32 %s12, 1
      %s258 = smul.u32 2, %s22
      %p259 = scmp.lt.s32.totalorder %s21, 1
      %s260 = scalar_select %p259, %s21, 1
      %p261 = scmp.lt.s32.totalorder %s258, 1
      %s262 = scalar_select %p261, %s258, 1
      %s263 = smul.addr %s260, 2
      %s264 = sadd.s32 %s262, %s263
      %s265 = smul.addr %s264, 8
      %s266 = scalar_lea.vmem %s0, %s265
      %p267 = pneg %p52
      %p268 = pneg %p49
      %p269 = pneg %p73
      %p270 = pneg %p70
      %p271 = pneg %p94
      %p272 = pneg %p91
      %p273 = pneg %p115
      %p274 = pneg %p112
      %p275 = scmp.lt.s32.totalorder %s21, 1
      %s276 = scalar_select %p275, %s21, 1
      %s277 = smul.addr %s276, 7
      %s278 = smul.addr %s277, 8
      %s279 = scalar_lea.vmem %s4, %s278
      %p280 = pneg %p141
      %p281 = pneg %p138
      %p282 = scmp.lt.s32.totalorder %s21, 1
      %s283 = scalar_select %p282, %s21, 1
      %s284 = smul.addr %s283, 8
      %s285 = scalar_lea.vmem %s5, %s284
      %p286 = pneg %p167
      %p287 = pneg %p164
      %p288 = pneg %p195
      %p289 = pneg %p192
      %s290 = smul.u32 2, %s22
      %p291 = scmp.lt.s32.totalorder %s21, 1
      %s292 = scalar_select %p291, %s21, 1
      %p293 = scmp.lt.s32.totalorder %s290, 1
      %s294 = scalar_select %p293, %s290, 1
      %s295 = smul.addr %s292, 2
      %s296 = sadd.s32 %s294, %s295
      %s297 = smul.addr %s296, 8
      %s298 = scalar_lea.vmem %s6, %s297
      %s299 = smul.u32 2, %s22
      %p300 = scmp.lt.s32.totalorder %s21, 1
      %s301 = scalar_select %p300, %s21, 1
      %p302 = scmp.lt.s32.totalorder %s299, 1
      %s303 = scalar_select %p302, %s299, 1
      %s304 = smul.addr %s301, 2
      %s305 = sadd.s32 %s303, %s304
      %s306 = smul.addr %s305, 8
      %s307 = scalar_lea.vmem %s0, %s306
      %s308 = smul.u32 2, %s22
      %p309 = scmp.lt.s32.totalorder %s21, 1
      %s310 = scalar_select %p309, %s21, 1
      %s311 = smul.addr %s310, 7
      %s312 = smul.addr %s311, 8
      %s313 = scalar_lea.vmem %s4, %s312
      %p314 = scmp.lt.s32.totalorder %s21, 1
      %s315 = scalar_select %p314, %s21, 1
      %s316 = smul.addr %s315, 8
      %s317 = scalar_lea.vmem %s5, %s316
      %s318 = smul.u32 2, %s22
      %p319 = scmp.lt.s32.totalorder %s21, 1
      %s320 = scalar_select %p319, %s21, 1
      %p321 = scmp.lt.s32.totalorder %s318, 1
      %s322 = scalar_select %p321, %s318, 1
      %s323 = smul.addr %s320, 2
      %s324 = sadd.s32 %s322, %s323
      %s325 = smul.addr %s324, 8
      %s326 = scalar_lea.vmem %s6, %s325
      %s327 = smul.u32 2, %s22
      %v329 = vld [vmem:[%s307] sm:$0xff]
      %v330 = vld [vmem:[%s307 + $0x8] sm:$0xff]
      %v331 = vpack.c.bf16 %v329, %v329
      %v332 = vpack.c.bf16 %v330, %v330
      %v333 = vld [vmem:[%s1] sm:$0xff]
      %v334 = vld [vmem:[%s1 + $0x8] sm:$0xff]
      %v335 = vld [vmem:[%s1 + $0x10] sm:$0xff]
      %v336 = vld [vmem:[%s1 + $0x18] sm:$0xff]
      %v337 = vld [vmem:[%s1 + $0x20] sm:$0xff]
      %v338 = vld [vmem:[%s1 + $0x28] sm:$0xff]
      %v339 = vld [vmem:[%s1 + $0x30] sm:$0xff]
      %v340 = vpack.c.bf16 %v334, %v333
      %v341 = vpack.c.bf16 %v336, %v335
      %v342 = vpack.c.bf16 %v338, %v337
      %v343 = vpack.c.bf16 %v339, %v339
      %v344 = vld [vmem:[%s2] sm:$0xff]
      %v345 = vld [vmem:[%s2 + $0x8] sm:$0xff]
      %v346 = vld [vmem:[%s2 + $0x10] sm:$0xff]
      %v347 = vld [vmem:[%s2 + $0x18] sm:$0xff]
      %v348 = vld [vmem:[%s2 + $0x20] sm:$0xff]
      %v349 = vld [vmem:[%s2 + $0x28] sm:$0xff]
      %v350 = vld [vmem:[%s2 + $0x30] sm:$0xff]
      %352 = vset.pattern.permute.xlu0 0
      %353 = vperm.xlu0 %352, %v344
      %v354 = vpop.permute.xlu0 %353
      %357 = vset.pattern.permute.xlu0 0
      %358 = vperm.xlu0 %357, %v345
      %v359 = vpop.permute.xlu0 %358
      %362 = vset.pattern.permute.xlu0 0
      %363 = vperm.xlu0 %362, %v346
      %v364 = vpop.permute.xlu0 %363
      %367 = vset.pattern.permute.xlu0 0
      %368 = vperm.xlu0 %367, %v347
      %v369 = vpop.permute.xlu0 %368
      %372 = vset.pattern.permute.xlu0 0
      %373 = vperm.xlu0 %372, %v348
      %v374 = vpop.permute.xlu0 %373
      %377 = vset.pattern.permute.xlu0 0
      %378 = vperm.xlu0 %377, %v349
      %v379 = vpop.permute.xlu0 %378
      %382 = vset.pattern.permute.xlu0 0
      %383 = vperm.xlu0 %382, %v350
      %v384 = vpop.permute.xlu0 %383
      %vm386 = vcmask 64512
      %v388 = vsel %vm386, %v340, 0
      %v391 = vsel %vm386, %v341, 0
      %v394 = vsel %vm386, %v342, 0
      %v397 = vsel %vm386, %v343, 0
      %vm399 = vcmask 1043456
      %v401 = vsel %vm399, %v331, 0
      %v404 = vsel %vm399, %v332, 0
      %406 = vmatprep.subr.bf16.mxu0 0
      %407 = vmatpush1.bf16.msra.mxu0 0
      %408 = vmatprep.subr.bf16.mxu0 0
      %409 = vmatpush1.bf16.msra.mxu0 0
      %410 = vmatprep.subr.bf16.mxu0 0
      %411 = vmatpush1.bf16.msra.mxu0 0
      %412 = vmatprep.subr.bf16.mxu0 0
      %413 = vmatpush1.bf16.msra.mxu0 0
      %414 = vmatprep.subr.bf16.mxu0 0
      %415 = vmatpush1.bf16.msra.mxu0 0
      %416 = vmatprep.subr.bf16.mxu0 0
      %417 = vmatpush1.bf16.msra.mxu0 0
      %418 = vmatprep.subr.bf16.mxu0 0
      %419 = vmatpush1.bf16.msra.mxu0 0
      %420 = vmatprep.subr.bf16.mxu0 %v404
      %421 = vmatpush1.bf16.msra.mxu0 %v401
      %422 = vmatprep.subr.bf16.mxu0 0
      %423 = vmatpush2.bf16.msra.mxu0 0
      %424 = vmatprep.subr.bf16.mxu0 0
      %425 = vmatpush2.bf16.msra.mxu0 0
      %426 = vmatprep.subr.bf16.mxu0 0
      %427 = vmatpush2.bf16.msra.mxu0 0
      %428 = vmatprep.subr.bf16.mxu0 0
      %429 = vmatpush2.bf16.msra.mxu0 0
      %430 = vmatprep.subr.bf16.mxu0 0
      %431 = vmatpush2.bf16.msra.mxu0 0
      %432 = vmatprep.subr.bf16.mxu0 0
      %433 = vmatpush2.bf16.msra.mxu0 0
      %434 = vmatprep.subr.bf16.mxu0 0
      %435 = vmatpush2.bf16.msra.mxu0 0
      %436 = vmatprep.subr.bf16.mxu0 0
      %437 = vmatpush2.bf16.msra.mxu0 0
      %438 = vmatprep.mubr.bf16.mxu0 0
      %439 = vmatmul.mubr.bf16.gmra.mxu0 %v388
      %v440 = vpop.f32.mrf.mxu0
      %v441 = vadd.f32 %v354, %v440
      %v442 = vpop.f32.mrf.mxu0
      %v443 = vadd.f32 %v354, %v442
      %v444 = vpop.f32.mrf.mxu0
      %v445 = vadd.f32 %v359, %v444
      %v446 = vpop.f32.mrf.mxu0
      %v447 = vadd.f32 %v359, %v446
      %448 = vmatprep.mubr.bf16.mxu0 0
      %449 = vmatmul.mubr.bf16.gmra.mxu0 %v391
      %v450 = vpop.f32.mrf.mxu0
      %v451 = vadd.f32 %v364, %v450
      %v452 = vpop.f32.mrf.mxu0
      %v453 = vadd.f32 %v364, %v452
      %v454 = vpop.f32.mrf.mxu0
      %v455 = vadd.f32 %v369, %v454
      %v456 = vpop.f32.mrf.mxu0
      %v457 = vadd.f32 %v369, %v456
      %458 = vmatprep.mubr.bf16.mxu0 0
      %459 = vmatmul.mubr.bf16.gmra.mxu0 %v394
      %v460 = vpop.f32.mrf.mxu0
      %v461 = vadd.f32 %v374, %v460
      %v462 = vpop.f32.mrf.mxu0
      %v463 = vadd.f32 %v374, %v462
      %v464 = vpop.f32.mrf.mxu0
      %v465 = vadd.f32 %v379, %v464
      %v466 = vpop.f32.mrf.mxu0
      %v467 = vadd.f32 %v379, %v466
      %468 = vmatprep.mubr.bf16.mxu0 0
      %469 = vmatmul.mubr.bf16.gmra.mxu0 %v397
      %v470 = vpop.f32.mrf.mxu0
      %v471 = vadd.f32 %v384, %v470
      %v472 = vpop.f32.mrf.mxu0
      %v473 = vadd.f32 %v384, %v472
      %v474 = vpop.f32.mrf.mxu0
      %v475 = vpop.f32.mrf.mxu0
      %476 = vdwg.mxu0
      %v477 = vmul.f32 %v441, 0.5
      %v478 = vmul.f32 %v443, 0.5
      %v479 = vmul.f32 %v445, 0.5
      %v480 = vmul.f32 %v447, 0.5
      %v481 = vmul.f32 %v451, 0.5
      %v482 = vmul.f32 %v453, 0.5
      %v483 = vmul.f32 %v455, 0.5
      %v484 = vmul.f32 %v457, 0.5
      %v485 = vmul.f32 %v461, 0.5
      %v486 = vmul.f32 %v463, 0.5
      %v487 = vmul.f32 %v465, 0.5
      %v488 = vmul.f32 %v467, 0.5
      %v489 = vmul.f32 %v471, 0.5
      %v490 = vmul.f32 %v473, 0.5
      %v491 = vmul.f32 %v441, 0.044715
      %v492 = vmul.f32 %v443, 0.044715
      %v493 = vmul.f32 %v445, 0.044715
      %v494 = vmul.f32 %v447, 0.044715
      %v495 = vmul.f32 %v451, 0.044715
      %v496 = vmul.f32 %v453, 0.044715
      %v497 = vmul.f32 %v455, 0.044715
      %v498 = vmul.f32 %v457, 0.044715
      %v499 = vmul.f32 %v461, 0.044715
      %v500 = vmul.f32 %v463, 0.044715
      %v501 = vmul.f32 %v465, 0.044715
      %v502 = vmul.f32 %v467, 0.044715
      %v503 = vmul.f32 %v471, 0.044715
      %v504 = vmul.f32 %v473, 0.044715
      %v505 = vmul.f32 %v491, %v441
      %v506 = vmul.f32 %v492, %v443
      %v507 = vmul.f32 %v493, %v445
      %v508 = vmul.f32 %v494, %v447
      %v509 = vmul.f32 %v495, %v451
      %v510 = vmul.f32 %v496, %v453
      %v511 = vmul.f32 %v497, %v455
      %v512 = vmul.f32 %v498, %v457
      %v513 = vmul.f32 %v499, %v461
      %v514 = vmul.f32 %v500, %v463
      %v515 = vmul.f32 %v501, %v465
      %v516 = vmul.f32 %v502, %v467
      %v517 = vmul.f32 %v503, %v471
      %v518 = vmul.f32 %v504, %v473
      %v519 = vmul.f32 %v505, %v441
      %v520 = vmul.f32 %v506, %v443
      %v521 = vmul.f32 %v507, %v445
      %v522 = vmul.f32 %v508, %v447
      %v523 = vmul.f32 %v509, %v451
      %v524 = vmul.f32 %v510, %v453
      %v525 = vmul.f32 %v511, %v455
      %v526 = vmul.f32 %v512, %v457
      %v527 = vmul.f32 %v513, %v461
      %v528 = vmul.f32 %v514, %v463
      %v529 = vmul.f32 %v515, %v465
      %v530 = vmul.f32 %v516, %v467
      %v531 = vmul.f32 %v517, %v471
      %v532 = vmul.f32 %v518, %v473
      %v533 = vadd.f32 %v441, %v519
      %v534 = vadd.f32 %v443, %v520
      %v535 = vadd.f32 %v445, %v521
      %v536 = vadd.f32 %v447, %v522
      %v537 = vadd.f32 %v451, %v523
      %v538 = vadd.f32 %v453, %v524
      %v539 = vadd.f32 %v455, %v525
      %v540 = vadd.f32 %v457, %v526
      %v541 = vadd.f32 %v461, %v527
      %v542 = vadd.f32 %v463, %v528
      %v543 = vadd.f32 %v465, %v529
      %v544 = vadd.f32 %v467, %v530
      %v545 = vadd.f32 %v471, %v531
      %v546 = vadd.f32 %v473, %v532
      %v547 = vmul.f32 %v533, 0.7978846
      %v548 = vmul.f32 %v534, 0.7978846
      %v549 = vmul.f32 %v535, 0.7978846
      %v550 = vmul.f32 %v536, 0.7978846
      %v551 = vmul.f32 %v537, 0.7978846
      %v552 = vmul.f32 %v538, 0.7978846
      %v553 = vmul.f32 %v539, 0.7978846
      %v554 = vmul.f32 %v540, 0.7978846
      %v555 = vmul.f32 %v541, 0.7978846
      %v556 = vmul.f32 %v542, 0.7978846
      %v557 = vmul.f32 %v543, 0.7978846
      %v558 = vmul.f32 %v544, 0.7978846
      %v559 = vmul.f32 %v545, 0.7978846
      %v560 = vmul.f32 %v546, 0.7978846
      %v561 = vtanh.pop %v547
      %v562 = vtanh.pop %v548
      %v563 = vtanh.pop %v549
      %v564 = vtanh.pop %v550
      %v565 = vtanh.pop %v551
      %v566 = vtanh.pop %v552
      %v567 = vtanh.pop %v553
      %v568 = vtanh.pop %v554
      %v569 = vtanh.pop %v555
      %v570 = vtanh.pop %v556
      %v571 = vtanh.pop %v557
      %v572 = vtanh.pop %v558
      %v573 = vtanh.pop %v559
      %v574 = vtanh.pop %v560
      %v575 = vadd.f32 %v561, 1.0
      %v576 = vadd.f32 %v562, 1.0
      %v577 = vadd.f32 %v563, 1.0
      %v578 = vadd.f32 %v564, 1.0
      %v579 = vadd.f32 %v565, 1.0
      %v580 = vadd.f32 %v566, 1.0
      %v581 = vadd.f32 %v567, 1.0
      %v582 = vadd.f32 %v568, 1.0
      %v583 = vadd.f32 %v569, 1.0
      %v584 = vadd.f32 %v570, 1.0
      %v585 = vadd.f32 %v571, 1.0
      %v586 = vadd.f32 %v572, 1.0
      %v587 = vadd.f32 %v573, 1.0
      %v588 = vadd.f32 %v574, 1.0
      %v589 = vmul.f32 %v477, %v575
      %v590 = vmul.f32 %v478, %v576
      %v591 = vmul.f32 %v479, %v577
      %v592 = vmul.f32 %v480, %v578
      %v593 = vmul.f32 %v481, %v579
      %v594 = vmul.f32 %v482, %v580
      %v595 = vmul.f32 %v483, %v581
      %v596 = vmul.f32 %v484, %v582
      %v597 = vmul.f32 %v485, %v583
      %v598 = vmul.f32 %v486, %v584
      %v599 = vmul.f32 %v487, %v585
      %v600 = vmul.f32 %v488, %v586
      %v601 = vmul.f32 %v489, %v587
      %v602 = vmul.f32 %v490, %v588
      %v603 = vld [vmem:[%s313] sm:$0xff]
      %v604 = vld [vmem:[%s313 + $0x8] sm:$0xff]
      %v605 = vld [vmem:[%s313 + $0x10] sm:$0xff]
      %v606 = vld [vmem:[%s313 + $0x18] sm:$0xff]
      %v607 = vld [vmem:[%s313 + $0x20] sm:$0xff]
      %v608 = vld [vmem:[%s313 + $0x28] sm:$0xff]
      %v609 = vld [vmem:[%s313 + $0x30] sm:$0xff]
      %611 = vset.pattern.permute.xlu0 0
      %612 = vperm.xlu0 %611, %v603
      %v613 = vpop.permute.xlu0 %612
      %616 = vset.pattern.permute.xlu0 0
      %617 = vperm.xlu0 %616, %v604
      %v618 = vpop.permute.xlu0 %617
      %621 = vset.pattern.permute.xlu0 0
      %622 = vperm.xlu0 %621, %v605
      %v623 = vpop.permute.xlu0 %622
      %626 = vset.pattern.permute.xlu0 0
      %627 = vperm.xlu0 %626, %v606
      %v628 = vpop.permute.xlu0 %627
      %631 = vset.pattern.permute.xlu0 0
      %632 = vperm.xlu0 %631, %v607
      %v633 = vpop.permute.xlu0 %632
      %636 = vset.pattern.permute.xlu0 0
      %637 = vperm.xlu0 %636, %v608
      %v638 = vpop.permute.xlu0 %637
      %641 = vset.pattern.permute.xlu0 0
      %642 = vperm.xlu0 %641, %v609
      %v643 = vpop.permute.xlu0 %642
      %v645 = vmul.f32 %v589, %v613
      %v646 = vmul.f32 %v590, %v613
      %v647 = vmul.f32 %v591, %v618
      %v648 = vmul.f32 %v592, %v618
      %v649 = vmul.f32 %v593, %v623
      %v650 = vmul.f32 %v594, %v623
      %v651 = vmul.f32 %v595, %v628
      %v652 = vmul.f32 %v596, %v628
      %v653 = vmul.f32 %v597, %v633
      %v654 = vmul.f32 %v598, %v633
      %v655 = vmul.f32 %v599, %v638
      %v656 = vmul.f32 %v600, %v638
      %v657 = vmul.f32 %v601, %v643
      %v658 = vmul.f32 %v602, %v643
      %v659 = vpack.c.bf16 %v647, %v645
      %v660 = vpack.c.bf16 %v648, %v646
      %v661 = vpack.c.bf16 %v651, %v649
      %v662 = vpack.c.bf16 %v652, %v650
      %v663 = vpack.c.bf16 %v655, %v653
      %v664 = vpack.c.bf16 %v656, %v654
      %v665 = vpack.c.bf16 %v657, %v657
      %v666 = vpack.c.bf16 %v658, %v658
      %v667 = vld [vmem:[%s3] sm:$0xff]
      %v668 = vpack.c.bf16 %v667, %v667
      %v669 = vld [vmem:[%s317] sm:$0xff]
      %671 = vset.pattern.permute.xlu0 0
      %672 = vperm.xlu0 %671, %v669
      %v673 = vpop.permute.xlu0 %672
      %vm675 = vcmask 457728
      %v677 = vsel %vm675, %v668, 0
      %v680 = vsel %vm399, %v665, 0
      %v683 = vsel %vm399, %v666, 0
      %685 = vmatprep.subr.bf16.mxu0 0
      %686 = vmatpush1.bf16.msra.mxu0 0
      %687 = vmatprep.subr.bf16.mxu0 0
      %688 = vmatpush1.bf16.msra.mxu0 0
      %689 = vmatprep.subr.bf16.mxu0 0
      %690 = vmatpush1.bf16.msra.mxu0 0
      %691 = vmatprep.subr.bf16.mxu0 0
      %692 = vmatpush1.bf16.msra.mxu0 0
      %693 = vmatprep.subr.bf16.mxu0 %v683
      %694 = vmatpush1.bf16.msra.mxu0 %v680
      %695 = vmatprep.subr.bf16.mxu0 %v664
      %696 = vmatpush1.bf16.msra.mxu0 %v663
      %697 = vmatprep.subr.bf16.mxu0 %v662
      %698 = vmatpush1.bf16.msra.mxu0 %v661
      %699 = vmatprep.subr.bf16.mxu0 %v660
      %700 = vmatpush1.bf16.msra.mxu0 %v659
      %701 = vmatprep.subr.bf16.mxu0 0
      %702 = vmatpush2.bf16.msra.mxu0 0
      %703 = vmatprep.subr.bf16.mxu0 0
      %704 = vmatpush2.bf16.msra.mxu0 0
      %705 = vmatprep.subr.bf16.mxu0 0
      %706 = vmatpush2.bf16.msra.mxu0 0
      %707 = vmatprep.subr.bf16.mxu0 0
      %708 = vmatpush2.bf16.msra.mxu0 0
      %709 = vmatprep.subr.bf16.mxu0 0
      %710 = vmatpush2.bf16.msra.mxu0 0
      %711 = vmatprep.subr.bf16.mxu0 0
      %712 = vmatpush2.bf16.msra.mxu0 0
      %713 = vmatprep.subr.bf16.mxu0 0
      %714 = vmatpush2.bf16.msra.mxu0 0
      %715 = vmatprep.subr.bf16.mxu0 0
      %716 = vmatpush2.bf16.msra.mxu0 0
      %717 = vmatprep.mubr.bf16.mxu0 0
      %718 = vmatmul.mubr.bf16.gmra.mxu0 %v677
      %v719 = vpop.f32.mrf.mxu0
      %v720 = vadd.f32 %v673, %v719
      %v721 = vpop.f32.mrf.mxu0
      %v722 = vadd.f32 %v673, %v721
      %v723 = vpop.f32.mrf.mxu0
      %v724 = vpop.f32.mrf.mxu0
      %725 = vdwg.mxu0
      %726 = vst [vmem:[%s326] sm:$0xff] %v720
      %727 = vst [vmem:[%s326 + $0x8] sm:$0xff] %v722
      %s728 = smul.u32 2, %s22
      %p729 = scmp.lt.s32.totalorder %s21, 1
      %s730 = scalar_select %p729, %s21, 1
      %p731 = scmp.lt.s32.totalorder %s728, 1
      %s732 = scalar_select %p731, %s728, 1
      %s733 = smul.addr %s730, 2
      %s734 = sadd.s32 %s732, %s733
      %s735 = smul.addr %s734, 8
      %s736 = scalar_lea.vmem %s6, %s735
      // Predicated region
      $region45: #{_forward_impl.3} parent=43 // pred_check
        %p737 = pneg %p192
      $region46: #{_forward_impl.3} parent=43 // pred_check_branch
        %739 = sbr.rel (%p737) target = $region48
      $region47: #{_forward_impl.3} parent=43 // pred_region
        %s740 = smul.u32 2, %s22
      $region48: #{_forward_impl.3} parent=43 // pred_fallthru
        _
    $region44: #{_forward_impl.3} parent=5 // pred_fallthru
      _
    %p741 = scmp.le.s32.totalorder 2, %s12
    // Predicated region
    $region49: #{_forward_impl.3} parent=5 // pred_check
      %p742 = pneg %p741
    $region50: #{_forward_impl.3} parent=5 // pred_check_branch
      %744 = sbr.rel (%p742) target = $region52
    $region51: #{_forward_impl.3} parent=5 // pred_region
      %s745 = ssub.s32 %s12, 2
      // Predicated region
      $region53: #{_forward_impl.3} parent=51 // pred_check
        %p746 = pneg %p198
      $region54: #{_forward_impl.3} parent=51 // pred_check_branch
        %748 = sbr.rel (%p746) target = $region56
      $region55: #{_forward_impl.3} parent=51 // pred_region
        %s749 = smul.u32 2, %s24
        %p750 = scmp.lt.s32.totalorder %s23, 1
        %s751 = scalar_select %p750, %s23, 1
        %p752 = scmp.lt.s32.totalorder %s749, 1
        %s753 = scalar_select %p752, %s749, 1
        %s754 = smul.addr %s751, 2
        %s755 = sadd.s32 %s753, %s754
        %s756 = smul.addr %s755, 8
        %s757 = scalar_lea.vmem %s6, %s756
      $region56: #{_forward_impl.3} parent=51 // pred_fallthru
        _
    $region52: #{_forward_impl.3} parent=5 // pred_fallthru
      _
  $region6: #{_forward_impl.3} parent=0 // loop_footer
    %s16 = sadd.s32 1, %s12
  $region7: #{_forward_impl.3} parent=0 // loop_footer_branch
    %11 = sbr.rel target = $region3
  $region8: #{_forward_impl.3} parent=0 // loop_exit
    _

</llo_original>
